<compile_context>
chip_gen: v7x
topology: tpu7x:2x2x1
jax: 0.10.0
libtpu: 0.0.40
codegen_flags: <defaults>
</compile_context>

<pallas_src>
import functools

import jax
import jax.numpy as jnp
from jax.experimental import pallas as pl
from jax.experimental.pallas import tpu as pltpu

KH = KW = 3  # kernel size


def _convt_kernel(x_ref, m_ref, o_ref, *, img_h):
    # x_ref: (N*H, W*Cin)        bf16 - all images' rows stacked on sublanes
    # m_ref: (3*W*Cin, W*Cout)   bf16 - block-Toeplitz weight, 3 row taps along K
    # o_ref: (N*H, W*Cout)       f32  - lane-dense output slab
    x = x_ref[...]
    nh = x.shape[0]
    k = x.shape[1]  # W*Cin

    # One matmul per row tap, all on the SAME unshifted x: no shifted-operand
    # concat/relayout in VMEM, the first matmul can issue immediately.
    # Static 8/16-aligned K-slices of the resident weight.
    p0 = jnp.dot(x, m_ref[0 * k:1 * k, :], preferred_element_type=jnp.float32)
    p1 = jnp.dot(x, m_ref[1 * k:2 * k, :], preferred_element_type=jnp.float32)
    p2 = jnp.dot(x, m_ref[2 * k:3 * k, :], preferred_element_type=jnp.float32)

    # out[r] = p0[r-1] + p1[r] + p2[r+1], with the shifted terms zeroed at
    # per-image boundary rows (r % img_h == 0 / img_h-1), which also kills the
    # roll wraparound rows.  Shifts are XLU sublane rotations on the f32
    # results (no extra operand memory, no bf16 vector ops).
    row = jax.lax.broadcasted_iota(jnp.int32, p1.shape, 0)
    row_in_img = row % img_h
    from_above = jnp.where(row_in_img != 0,
                           pltpu.roll(p0, shift=1, axis=0), 0.0)
    # shift by nh-1 == shift by -1 (kept non-negative for the rotate lowering)
    from_below = jnp.where(row_in_img != img_h - 1,
                           pltpu.roll(p2, shift=nh - 1, axis=0), 0.0)
    o_ref[...] = from_above + p1 + from_below


def _pack_weight(weight, W):
    """PyTorch ConvTranspose2d weight (Cin, Cout, 3, 3) -> block-Toeplitz
    matmul weight of shape (3*W*Cin, W*Cout), bf16.

    In a real model this packing is done ONCE at init time and the packed
    matrix kept device-resident (it is the dominant HBM-traffic term here)."""
    Cin, Cout, _, _ = weight.shape
    # Direct-conv equivalent weight: Wd[i, j, ci, co] = weight[ci, co, 2-i, 2-j]
    Wd = jnp.transpose(weight[:, :, ::-1, ::-1], (2, 3, 0, 1))        # (3, 3, Cin, Cout)
    # bands[j, p, w] = 1 iff input column p contributes to output column w for
    # column tap j (out-of-range columns never appear -> width zero-padding).
    bands = jnp.stack(
        [jnp.eye(W, k=1 - j, dtype=weight.dtype) for j in range(KW)]
    )                                                                 # (3, W, W)
    # M[i, p, ci, w, co] = Wd[i, p-w+1, ci, co] if 0 <= p-w+1 <= 2 else 0
    M = jnp.einsum("jpw,ijcd->ipcwd", bands, Wd)                      # (3, W, Cin, W, Cout)
    return M.reshape(KH * W * Cin, W * Cout).astype(jnp.bfloat16)     # (3*W*Cin, W*Cout)


def conv_transpose2d_pallas(x_nchw, weight):
    """x_nchw: (N, Cin, H, W) f32.  weight: (Cin, Cout, 3, 3) f32 (PyTorch
    ConvTranspose2d layout).  Returns (N, Cout, H, W)."""
    N, Cin, H, W = x_nchw.shape
    Cin_w, Cout, kh, kw = weight.shape
    assert (Cin_w, kh, kw) == (Cin, KH, KW)

    m_packed = _pack_weight(weight, W)                                # (1536, 512) bf16

    # NCHW -> (N*H, W*Cin) bf16: one fused XLA transpose+reshape+cast.
    x_rows = (
        jnp.transpose(x_nchw, (0, 2, 3, 1))
        .reshape(N * H, W * Cin)
        .astype(jnp.bfloat16)
    )

    # Advisory cost so XLA can overlap the surrounding transposes with the
    # (DMA-dominated) kernel.
    cost = pl.CostEstimate(
        flops=2 * (N * H) * (KH * W * Cin) * (W * Cout),
        transcendentals=0,
        bytes_accessed=(m_packed.size * 2              # packed weight (bf16)
                        + x_rows.size * 2              # activations (bf16)
                        + N * H * W * Cout * 4),       # output (f32)
    )

    out_rows = pl.pallas_call(
        functools.partial(_convt_kernel, img_h=H),
        out_shape=jax.ShapeDtypeStruct((N * H, W * Cout), jnp.float32),
        grid=(1,),  # whole (small) batch in one step; no per-step overhead
        in_specs=[
            pl.BlockSpec((N * H, W * Cin), lambda i: (0, 0)),
            pl.BlockSpec((KH * W * Cin, W * Cout), lambda i: (0, 0)),
        ],
        out_specs=pl.BlockSpec((N * H, W * Cout), lambda i: (0, 0)),
        compiler_params=pltpu.CompilerParams(
            dimension_semantics=("arbitrary",),
        ),
        cost_estimate=cost,
    )(x_rows, m_packed)

    # (N*H, W*Cout) -> NCHW
    out_nhwc = out_rows.reshape(N, H, W, Cout)
    return jnp.transpose(out_nhwc, (0, 3, 1, 2)).astype(x_nchw.dtype)


def _reference(x_nchw, weight):
    # Pure-JAX f32 reference: stride-1 ConvTranspose2d via flipped direct conv.
    w_flipped = weight[:, :, ::-1, ::-1]
    w_direct = jnp.transpose(w_flipped, (1, 0, 2, 3))  # (Cout, Cin, 3, 3)
    return jax.lax.conv_general_dilated(
        x_nchw, w_direct,
        window_strides=(1, 1), padding=((1, 1), (1, 1)),
        dimension_numbers=("NCHW", "OIHW", "NCHW"),
    )


if __name__ == "__main__":
    key = jax.random.PRNGKey(0)
    k_x, k_w = jax.random.split(key)

    # Shapes consistent with the module: Cin = Cout = 32.
    N, Cin, Cout, H, W = 2, 32, 32, 16, 16

    x = jax.random.normal(k_x, (N, Cin, H, W), dtype=jnp.float32)
    bound = 1.0 / (Cin * KH * KW) ** 0.5
    w = jax.random.uniform(k_w, (Cin, Cout, KH, KW),
                           minval=-bound, maxval=bound, dtype=jnp.float32)

    conv_fn = jax.jit(conv_transpose2d_pallas)
    out = jax.block_until_ready(conv_fn(x, w))

    ref = jax.block_until_ready(_reference(x, w))
    assert out.shape == (N, Cout, H, W)
    # bf16 operands with f32 accumulation: loosen tolerance vs the f32 reference.
    assert jnp.allclose(out, ref, atol=3e-2, rtol=3e-2)

    print("KERNEL_OK")
</pallas_src>

<mosaic_0001>
module attributes {stable_mosaic.version = 11 : i64} {
  func.func @_convt_kernel(%arg0: i32, %arg1: memref<32x512xbf16, #tpu.memory_space<vmem>>, %arg2: memref<1536x512xbf16, #tpu.memory_space<vmem>>, %arg3: memref<32x512xf32, #tpu.memory_space<vmem>>) attributes {dimension_semantics = [#tpu.dimension_semantics<arbitrary>], iteration_bounds = array<i64: 1>, scalar_prefetch = 0 : i64, scratch_operands = 0 : i64, tpu.core_type = #tpu.core_type<tc>, window_params = [{pipeline_mode = #tpu.pipeline_mode<synchronous>, transform_indices = @transform_0, window_bounds = array<i64: 32, 512>}, {pipeline_mode = #tpu.pipeline_mode<synchronous>, transform_indices = @transform_1, window_bounds = array<i64: 1536, 512>}, {pipeline_mode = #tpu.pipeline_mode<synchronous>, transform_indices = @transform_2, window_bounds = array<i64: 32, 512>}]} {
    %c0 = arith.constant 0 : index
    %c0_0 = arith.constant 0 : index
    %0 = vector.load %arg1[%c0, %c0_0] : memref<32x512xbf16, #tpu.memory_space<vmem>>, vector<32x512xbf16>
    %c0_1 = arith.constant 0 : index
    %c0_2 = arith.constant 0 : index
    %1 = vector.load %arg2[%c0_1, %c0_2] : memref<1536x512xbf16, #tpu.memory_space<vmem>>, vector<512x512xbf16>
    %cst = arith.constant dense<0.000000e+00> : vector<32x512xf32>
    %2 = tpu.matmul %0, %1, %cst {dimension_numbers = #tpu.dot_dimension_numbers<[1], [0], [0], [1], [0, 0, 1, 1], [], []>} : vector<32x512xbf16>, vector<512x512xbf16>, vector<32x512xf32> -> vector<32x512xf32>
    %c512 = arith.constant 512 : index
    %c0_3 = arith.constant 0 : index
    %3 = vector.load %arg2[%c512, %c0_3] : memref<1536x512xbf16, #tpu.memory_space<vmem>>, vector<512x512xbf16>
    %cst_4 = arith.constant dense<0.000000e+00> : vector<32x512xf32>
    %4 = tpu.matmul %0, %3, %cst_4 {dimension_numbers = #tpu.dot_dimension_numbers<[1], [0], [0], [1], [0, 0, 1, 1], [], []>} : vector<32x512xbf16>, vector<512x512xbf16>, vector<32x512xf32> -> vector<32x512xf32>
    %c1024 = arith.constant 1024 : index
    %c0_5 = arith.constant 0 : index
    %5 = vector.load %arg2[%c1024, %c0_5] : memref<1536x512xbf16, #tpu.memory_space<vmem>>, vector<512x512xbf16>
    %cst_6 = arith.constant dense<0.000000e+00> : vector<32x512xf32>
    %6 = tpu.matmul %0, %5, %cst_6 {dimension_numbers = #tpu.dot_dimension_numbers<[1], [0], [0], [1], [0, 0, 1, 1], [], []>} : vector<32x512xbf16>, vector<512x512xbf16>, vector<32x512xf32> -> vector<32x512xf32>
    %7 = tpu.iota {dimensions = array<i32: 0>} : vector<32x512xi32>
    %c16_i32 = arith.constant 16 : i32
    %c0_i32 = arith.constant 0 : i32
    %8 = arith.cmpi eq, %c16_i32, %c0_i32 : i32
    %c1_i32 = arith.constant 1 : i32
    %9 = arith.select %8, %c1_i32, %c16_i32 : i32
    %10 = vector.broadcast %9 : i32 to vector<32x512xi32>
    %11 = arith.remsi %7, %10 : vector<32x512xi32>
    %c0_i32_7 = arith.constant 0 : i32
    %12 = vector.broadcast %c0_i32_7 : i32 to vector<32x512xi32>
    %13 = arith.cmpi ne, %11, %12 : vector<32x512xi32>
    %c0_i32_8 = arith.constant 0 : i32
    %14 = vector.broadcast %c0_i32_8 : i32 to vector<32x512xi32>
    %15 = arith.cmpi slt, %11, %14 : vector<32x512xi32>
    %c0_i32_9 = arith.constant 0 : i32
    %16 = arith.cmpi slt, %9, %c0_i32_9 : i32
    %17 = vector.broadcast %16 : i1 to vector<32x512xi1>
    %18 = vector.broadcast %17 : vector<32x512xi1> to vector<32x512xi1>
    %19 = arith.xori %15, %18 : vector<32x512xi1>
    %20 = arith.andi %19, %13 : vector<32x512xi1>
    %21 = vector.broadcast %9 : i32 to vector<32x512xi32>
    %22 = arith.addi %11, %21 : vector<32x512xi32>
    %23 = arith.select %20, %22, %11 : vector<32x512xi1>, vector<32x512xi32>
    %c0_i32_10 = arith.constant 0 : i32
    %24 = vector.broadcast %c0_i32_10 : i32 to vector<32x512xi32>
    %25 = arith.cmpi ne, %23, %24 : vector<32x512xi32>
    %c1_i32_11 = arith.constant 1 : i32
    %26 = tpu.dynamic_rotate %2 by %c1_i32_11 dim 0 : vector<32x512xf32>, i32 -> vector<32x512xf32>
    %cst_12 = arith.constant 0.000000e+00 : f32
    %27 = vector.broadcast %cst_12 : f32 to vector<32x512xf32>
    %28 = arith.select %25, %26, %27 : vector<32x512xi1>, vector<32x512xf32>
    %c15_i32 = arith.constant 15 : i32
    %29 = vector.broadcast %c15_i32 : i32 to vector<32x512xi32>
    %30 = arith.cmpi ne, %23, %29 : vector<32x512xi32>
    %c31_i32 = arith.constant 31 : i32
    %31 = tpu.dynamic_rotate %6 by %c31_i32 dim 0 : vector<32x512xf32>, i32 -> vector<32x512xf32>
    %cst_13 = arith.constant 0.000000e+00 : f32
    %32 = vector.broadcast %cst_13 : f32 to vector<32x512xf32>
    %33 = arith.select %30, %31, %32 : vector<32x512xi1>, vector<32x512xf32>
    %34 = arith.addf %28, %4 : vector<32x512xf32>
    %35 = arith.addf %34, %33 : vector<32x512xf32>
    %c0_14 = arith.constant 0 : index
    %c0_15 = arith.constant 0 : index
    %36 = vector.load %arg3[%c0_14, %c0_15] : memref<32x512xf32, #tpu.memory_space<vmem>>, vector<32x512xf32>
    tpu.vector_store %arg3[%c0_14, %c0_15], %35 {strides = array<i32>} : memref<32x512xf32, #tpu.memory_space<vmem>>, vector<32x512xf32>,
    return
  }
  func.func @transform_0(%arg0: i32) -> (i32, i32) {
    %c0_i32 = arith.constant 0 : i32
    %c0_i32_0 = arith.constant 0 : i32
    %c0_i32_1 = arith.constant 0 : i32
    return %c0_i32, %c0_i32_0 : i32, i32
  }
  func.func @transform_1(%arg0: i32) -> (i32, i32) {
    %c0_i32 = arith.constant 0 : i32
    %c0_i32_0 = arith.constant 0 : i32
    %c0_i32_1 = arith.constant 0 : i32
    return %c0_i32, %c0_i32_0 : i32, i32
  }
  func.func @transform_2(%arg0: i32) -> (i32, i32) {
    %c0_i32 = arith.constant 0 : i32
    %c0_i32_0 = arith.constant 0 : i32
    %c0_i32_1 = arith.constant 0 : i32
    return %c0_i32, %c0_i32_0 : i32, i32
  }
}

</mosaic_0001>

<llo_original>
// kernel: conv_transpose2d_pallas.1
$region0: #{conv_transpose2d_pallas.1}
  #allocation0 [shape = 'u32[]', space=smem, size = 0x4, offset = 0x4, fixed_abs, tag = 'smem constant byte address 0x4 - core index']
  #allocation1 [shape = 'u32[144,128]{1,0:T(1,128)}', space=vmem, size = 0x12000, scoped, tag = 'internal scratch']
  %s0 = inlined_call_operand.vmem [shape: bf16[32,512], index: 0, kind: input, shape index: {}]
  %s1 = inlined_call_operand.vmem [shape: bf16[1536,512], index: 1, kind: input, shape index: {}]
  %s2 = inlined_call_operand.vmem [shape: f32[32,512], index: 2, kind: output, shape index: {}]
  %s3 = sld [smem:[#allocation0]]
  $region18: #{conv_transpose2d_pallas.1} parent=0
    _
  %s5 = ssub.s32 1, %s3
  %s6 = scalar_select 0, %s5, %s3
  // Predicated region
  $region2: #{conv_transpose2d_pallas.1} parent=0 // pred_check
    _
  $region3: #{conv_transpose2d_pallas.1} parent=0 // pred_check_branch
    %8 = sbr.rel (0) target = $region5
  $region4: #{conv_transpose2d_pallas.1} parent=0 // pred_region
    _
  $region5: #{conv_transpose2d_pallas.1} parent=0 // pred_fallthru
    _
  // Predicated region
  $region6: #{conv_transpose2d_pallas.1} parent=0 // pred_check
    _
  $region7: #{conv_transpose2d_pallas.1} parent=0 // pred_check_branch
    %10 = sbr.rel (0) target = $region9
  $region8: #{conv_transpose2d_pallas.1} parent=0 // pred_region
    _
  $region9: #{conv_transpose2d_pallas.1} parent=0 // pred_fallthru
    _
  %v11 = vld [vmem:[%s0] sm:$0xff]
  %v12 = vld [vmem:[%s0 + $0x8] sm:$0xff]
  %v13 = vld [vmem:[%s0 + $0x10] sm:$0xff]
  %v14 = vld [vmem:[%s0 + $0x18] sm:$0xff]
  %v15 = vld [vmem:[%s0 + $0x20] sm:$0xff]
  %v16 = vld [vmem:[%s0 + $0x28] sm:$0xff]
  %v17 = vld [vmem:[%s0 + $0x30] sm:$0xff]
  %v18 = vld [vmem:[%s0 + $0x38] sm:$0xff]
  %v19 = vld [vmem:[%s1] sm:$0xff]
  %v20 = vld [vmem:[%s1 + $0x8] sm:$0xff]
  %v21 = vld [vmem:[%s1 + $0x10] sm:$0xff]
  %v22 = vld [vmem:[%s1 + $0x18] sm:$0xff]
  %v23 = vld [vmem:[%s1 + $0x20] sm:$0xff]
  %v24 = vld [vmem:[%s1 + $0x28] sm:$0xff]
  %v25 = vld [vmem:[%s1 + $0x30] sm:$0xff]
  %v26 = vld [vmem:[%s1 + $0x38] sm:$0xff]
  %v27 = vld [vmem:[%s1 + $0x40] sm:$0xff]
  %v28 = vld [vmem:[%s1 + $0x48] sm:$0xff]
  %v29 = vld [vmem:[%s1 + $0x50] sm:$0xff]
  %v30 = vld [vmem:[%s1 + $0x58] sm:$0xff]
  %v31 = vld [vmem:[%s1 + $0x60] sm:$0xff]
  %v32 = vld [vmem:[%s1 + $0x68] sm:$0xff]
  %v33 = vld [vmem:[%s1 + $0x70] sm:$0xff]
  %v34 = vld [vmem:[%s1 + $0x78] sm:$0xff]
  %v35 = vld [vmem:[%s1 + $0x80] sm:$0xff]
  %v36 = vld [vmem:[%s1 + $0x88] sm:$0xff]
  %v37 = vld [vmem:[%s1 + $0x90] sm:$0xff]
  %v38 = vld [vmem:[%s1 + $0x98] sm:$0xff]
  %v39 = vld [vmem:[%s1 + $0xa0] sm:$0xff]
  %v40 = vld [vmem:[%s1 + $0xa8] sm:$0xff]
  %v41 = vld [vmem:[%s1 + $0xb0] sm:$0xff]
  %v42 = vld [vmem:[%s1 + $0xb8] sm:$0xff]
  %v43 = vld [vmem:[%s1 + $0xc0] sm:$0xff]
  %v44 = vld [vmem:[%s1 + $0xc8] sm:$0xff]
  %v45 = vld [vmem:[%s1 + $0xd0] sm:$0xff]
  %v46 = vld [vmem:[%s1 + $0xd8] sm:$0xff]
  %v47 = vld [vmem:[%s1 + $0xe0] sm:$0xff]
  %v48 = vld [vmem:[%s1 + $0xe8] sm:$0xff]
  %v49 = vld [vmem:[%s1 + $0xf0] sm:$0xff]
  %v50 = vld [vmem:[%s1 + $0xf8] sm:$0xff]
  %v51 = vld [vmem:[%s1 + $0x100] sm:$0xff]
  %v52 = vld [vmem:[%s1 + $0x108] sm:$0xff]
  %v53 = vld [vmem:[%s1 + $0x110] sm:$0xff]
  %v54 = vld [vmem:[%s1 + $0x118] sm:$0xff]
  %v55 = vld [vmem:[%s1 + $0x120] sm:$0xff]
  %v56 = vld [vmem:[%s1 + $0x128] sm:$0xff]
  %v57 = vld [vmem:[%s1 + $0x130] sm:$0xff]
  %v58 = vld [vmem:[%s1 + $0x138] sm:$0xff]
  %v59 = vld [vmem:[%s1 + $0x140] sm:$0xff]
  %v60 = vld [vmem:[%s1 + $0x148] sm:$0xff]
  %v61 = vld [vmem:[%s1 + $0x150] sm:$0xff]
  %v62 = vld [vmem:[%s1 + $0x158] sm:$0xff]
  %v63 = vld [vmem:[%s1 + $0x160] sm:$0xff]
  %v64 = vld [vmem:[%s1 + $0x168] sm:$0xff]
  %v65 = vld [vmem:[%s1 + $0x170] sm:$0xff]
  %v66 = vld [vmem:[%s1 + $0x178] sm:$0xff]
  %v67 = vld [vmem:[%s1 + $0x180] sm:$0xff]
  %v68 = vld [vmem:[%s1 + $0x188] sm:$0xff]
  %v69 = vld [vmem:[%s1 + $0x190] sm:$0xff]
  %v70 = vld [vmem:[%s1 + $0x198] sm:$0xff]
  %v71 = vld [vmem:[%s1 + $0x1a0] sm:$0xff]
  %v72 = vld [vmem:[%s1 + $0x1a8] sm:$0xff]
  %v73 = vld [vmem:[%s1 + $0x1b0] sm:$0xff]
  %v74 = vld [vmem:[%s1 + $0x1b8] sm:$0xff]
  %v75 = vld [vmem:[%s1 + $0x1c0] sm:$0xff]
  %v76 = vld [vmem:[%s1 + $0x1c8] sm:$0xff]
  %v77 = vld [vmem:[%s1 + $0x1d0] sm:$0xff]
  %v78 = vld [vmem:[%s1 + $0x1d8] sm:$0xff]
  %v79 = vld [vmem:[%s1 + $0x1e0] sm:$0xff]
  %v80 = vld [vmem:[%s1 + $0x1e8] sm:$0xff]
  %v81 = vld [vmem:[%s1 + $0x1f0] sm:$0xff]
  %v82 = vld [vmem:[%s1 + $0x1f8] sm:$0xff]
  %v83 = vld [vmem:[%s1 + $0x200] sm:$0xff]
  %v84 = vld [vmem:[%s1 + $0x208] sm:$0xff]
  %v85 = vld [vmem:[%s1 + $0x210] sm:$0xff]
  %v86 = vld [vmem:[%s1 + $0x218] sm:$0xff]
  %v87 = vld [vmem:[%s1 + $0x220] sm:$0xff]
  %v88 = vld [vmem:[%s1 + $0x228] sm:$0xff]
  %v89 = vld [vmem:[%s1 + $0x230] sm:$0xff]
  %v90 = vld [vmem:[%s1 + $0x238] sm:$0xff]
  %v91 = vld [vmem:[%s1 + $0x240] sm:$0xff]
  %v92 = vld [vmem:[%s1 + $0x248] sm:$0xff]
  %v93 = vld [vmem:[%s1 + $0x250] sm:$0xff]
  %v94 = vld [vmem:[%s1 + $0x258] sm:$0xff]
  %v95 = vld [vmem:[%s1 + $0x260] sm:$0xff]
  %v96 = vld [vmem:[%s1 + $0x268] sm:$0xff]
  %v97 = vld [vmem:[%s1 + $0x270] sm:$0xff]
  %v98 = vld [vmem:[%s1 + $0x278] sm:$0xff]
  %v99 = vld [vmem:[%s1 + $0x280] sm:$0xff]
  %v100 = vld [vmem:[%s1 + $0x288] sm:$0xff]
  %v101 = vld [vmem:[%s1 + $0x290] sm:$0xff]
  %v102 = vld [vmem:[%s1 + $0x298] sm:$0xff]
  %v103 = vld [vmem:[%s1 + $0x2a0] sm:$0xff]
  %v104 = vld [vmem:[%s1 + $0x2a8] sm:$0xff]
  %v105 = vld [vmem:[%s1 + $0x2b0] sm:$0xff]
  %v106 = vld [vmem:[%s1 + $0x2b8] sm:$0xff]
  %v107 = vld [vmem:[%s1 + $0x2c0] sm:$0xff]
  %v108 = vld [vmem:[%s1 + $0x2c8] sm:$0xff]
  %v109 = vld [vmem:[%s1 + $0x2d0] sm:$0xff]
  %v110 = vld [vmem:[%s1 + $0x2d8] sm:$0xff]
  %v111 = vld [vmem:[%s1 + $0x2e0] sm:$0xff]
  %v112 = vld [vmem:[%s1 + $0x2e8] sm:$0xff]
  %v113 = vld [vmem:[%s1 + $0x2f0] sm:$0xff]
  %v114 = vld [vmem:[%s1 + $0x2f8] sm:$0xff]
  %v115 = vld [vmem:[%s1 + $0x300] sm:$0xff]
  %v116 = vld [vmem:[%s1 + $0x308] sm:$0xff]
  %v117 = vld [vmem:[%s1 + $0x310] sm:$0xff]
  %v118 = vld [vmem:[%s1 + $0x318] sm:$0xff]
  %v119 = vld [vmem:[%s1 + $0x320] sm:$0xff]
  %v120 = vld [vmem:[%s1 + $0x328] sm:$0xff]
  %v121 = vld [vmem:[%s1 + $0x330] sm:$0xff]
  %v122 = vld [vmem:[%s1 + $0x338] sm:$0xff]
  %v123 = vld [vmem:[%s1 + $0x340] sm:$0xff]
  %v124 = vld [vmem:[%s1 + $0x348] sm:$0xff]
  %v125 = vld [vmem:[%s1 + $0x350] sm:$0xff]
  %v126 = vld [vmem:[%s1 + $0x358] sm:$0xff]
  %v127 = vld [vmem:[%s1 + $0x360] sm:$0xff]
  %v128 = vld [vmem:[%s1 + $0x368] sm:$0xff]
  %v129 = vld [vmem:[%s1 + $0x370] sm:$0xff]
  %v130 = vld [vmem:[%s1 + $0x378] sm:$0xff]
  %v131 = vld [vmem:[%s1 + $0x380] sm:$0xff]
  %v132 = vld [vmem:[%s1 + $0x388] sm:$0xff]
  %v133 = vld [vmem:[%s1 + $0x390] sm:$0xff]
  %v134 = vld [vmem:[%s1 + $0x398] sm:$0xff]
  %v135 = vld [vmem:[%s1 + $0x3a0] sm:$0xff]
  %v136 = vld [vmem:[%s1 + $0x3a8] sm:$0xff]
  %v137 = vld [vmem:[%s1 + $0x3b0] sm:$0xff]
  %v138 = vld [vmem:[%s1 + $0x3b8] sm:$0xff]
  %v139 = vld [vmem:[%s1 + $0x3c0] sm:$0xff]
  %v140 = vld [vmem:[%s1 + $0x3c8] sm:$0xff]
  %v141 = vld [vmem:[%s1 + $0x3d0] sm:$0xff]
  %v142 = vld [vmem:[%s1 + $0x3d8] sm:$0xff]
  %v143 = vld [vmem:[%s1 + $0x3e0] sm:$0xff]
  %v144 = vld [vmem:[%s1 + $0x3e8] sm:$0xff]
  %v145 = vld [vmem:[%s1 + $0x3f0] sm:$0xff]
  %v146 = vld [vmem:[%s1 + $0x3f8] sm:$0xff]
  %v155 = vunpack.c.l.b16 %v11
  %v156 = vunpack.c.h.b16 %v11
  %v157 = vunpack.c.l.b16 %v12
  %v158 = vunpack.c.h.b16 %v12
  %v159 = vunpack.c.l.b16 %v13
  %v160 = vunpack.c.h.b16 %v13
  %v161 = vunpack.c.l.b16 %v14
  %v162 = vunpack.c.h.b16 %v14
  %v163 = vunpack.c.l.b16 %v15
  %v164 = vunpack.c.h.b16 %v15
  %v165 = vunpack.c.l.b16 %v16
  %v166 = vunpack.c.h.b16 %v16
  %v167 = vunpack.c.l.b16 %v17
  %v168 = vunpack.c.h.b16 %v17
  %v169 = vunpack.c.l.b16 %v18
  %v170 = vunpack.c.h.b16 %v18
  %v171 = vpack.c.b16 %v159, %v155
  %v172 = vpack.c.b16 %v160, %v156
  %v173 = vpack.c.b16 %v161, %v157
  %v174 = vpack.c.b16 %v162, %v158
  %v175 = vpack.c.b16 %v167, %v163
  %v176 = vpack.c.b16 %v168, %v164
  %v177 = vpack.c.b16 %v169, %v165
  %v178 = vpack.c.b16 %v170, %v166
  %v315 = vunpack.c.l.b16 %v19
  %v316 = vunpack.c.h.b16 %v19
  %v317 = vunpack.c.l.b16 %v20
  %v318 = vunpack.c.h.b16 %v20
  %v319 = vunpack.c.l.b16 %v21
  %v320 = vunpack.c.h.b16 %v21
  %v321 = vunpack.c.l.b16 %v22
  %v322 = vunpack.c.h.b16 %v22
  %v323 = vunpack.c.l.b16 %v23
  %v324 = vunpack.c.h.b16 %v23
  %v325 = vunpack.c.l.b16 %v24
  %v326 = vunpack.c.h.b16 %v24
  %v327 = vunpack.c.l.b16 %v25
  %v328 = vunpack.c.h.b16 %v25
  %v329 = vunpack.c.l.b16 %v26
  %v330 = vunpack.c.h.b16 %v26
  %v331 = vunpack.c.l.b16 %v27
  %v332 = vunpack.c.h.b16 %v27
  %v333 = vunpack.c.l.b16 %v28
  %v334 = vunpack.c.h.b16 %v28
  %v335 = vunpack.c.l.b16 %v29
  %v336 = vunpack.c.h.b16 %v29
  %v337 = vunpack.c.l.b16 %v30
  %v338 = vunpack.c.h.b16 %v30
  %v339 = vunpack.c.l.b16 %v31
  %v340 = vunpack.c.h.b16 %v31
  %v341 = vunpack.c.l.b16 %v32
  %v342 = vunpack.c.h.b16 %v32
  %v343 = vunpack.c.l.b16 %v33
  %v344 = vunpack.c.h.b16 %v33
  %v345 = vunpack.c.l.b16 %v34
  %v346 = vunpack.c.h.b16 %v34
  %v347 = vunpack.c.l.b16 %v35
  %v348 = vunpack.c.h.b16 %v35
  %v349 = vunpack.c.l.b16 %v36
  %v350 = vunpack.c.h.b16 %v36
  %v351 = vunpack.c.l.b16 %v37
  %v352 = vunpack.c.h.b16 %v37
  %v353 = vunpack.c.l.b16 %v38
  %v354 = vunpack.c.h.b16 %v38
  %v355 = vunpack.c.l.b16 %v39
  %v356 = vunpack.c.h.b16 %v39
  %v357 = vunpack.c.l.b16 %v40
  %v358 = vunpack.c.h.b16 %v40
  %v359 = vunpack.c.l.b16 %v41
  %v360 = vunpack.c.h.b16 %v41
  %v361 = vunpack.c.l.b16 %v42
  %v362 = vunpack.c.h.b16 %v42
  %v363 = vunpack.c.l.b16 %v43
  %v364 = vunpack.c.h.b16 %v43
  %v365 = vunpack.c.l.b16 %v44
  %v366 = vunpack.c.h.b16 %v44
  %v367 = vunpack.c.l.b16 %v45
  %v368 = vunpack.c.h.b16 %v45
  %v369 = vunpack.c.l.b16 %v46
  %v370 = vunpack.c.h.b16 %v46
  %v371 = vunpack.c.l.b16 %v47
  %v372 = vunpack.c.h.b16 %v47
  %v373 = vunpack.c.l.b16 %v48
  %v374 = vunpack.c.h.b16 %v48
  %v375 = vunpack.c.l.b16 %v49
  %v376 = vunpack.c.h.b16 %v49
  %v377 = vunpack.c.l.b16 %v50
  %v378 = vunpack.c.h.b16 %v50
  %v379 = vunpack.c.l.b16 %v51
  %v380 = vunpack.c.h.b16 %v51
  %v381 = vunpack.c.l.b16 %v52
  %v382 = vunpack.c.h.b16 %v52
  %v383 = vunpack.c.l.b16 %v53
  %v384 = vunpack.c.h.b16 %v53
  %v385 = vunpack.c.l.b16 %v54
  %v386 = vunpack.c.h.b16 %v54
  %v387 = vunpack.c.l.b16 %v55
  %v388 = vunpack.c.h.b16 %v55
  %v389 = vunpack.c.l.b16 %v56
  %v390 = vunpack.c.h.b16 %v56
  %v391 = vunpack.c.l.b16 %v57
  %v392 = vunpack.c.h.b16 %v57
  %v393 = vunpack.c.l.b16 %v58
  %v394 = vunpack.c.h.b16 %v58
  %v395 = vunpack.c.l.b16 %v59
  %v396 = vunpack.c.h.b16 %v59
  %v397 = vunpack.c.l.b16 %v60
  %v398 = vunpack.c.h.b16 %v60
  %v399 = vunpack.c.l.b16 %v61
  %v400 = vunpack.c.h.b16 %v61
  %v401 = vunpack.c.l.b16 %v62
  %v402 = vunpack.c.h.b16 %v62
  %v403 = vunpack.c.l.b16 %v63
  %v404 = vunpack.c.h.b16 %v63
  %v405 = vunpack.c.l.b16 %v64
  %v406 = vunpack.c.h.b16 %v64
  %v407 = vunpack.c.l.b16 %v65
  %v408 = vunpack.c.h.b16 %v65
  %v409 = vunpack.c.l.b16 %v66
  %v410 = vunpack.c.h.b16 %v66
  %v411 = vunpack.c.l.b16 %v67
  %v412 = vunpack.c.h.b16 %v67
  %v413 = vunpack.c.l.b16 %v68
  %v414 = vunpack.c.h.b16 %v68
  %v415 = vunpack.c.l.b16 %v69
  %v416 = vunpack.c.h.b16 %v69
  %v417 = vunpack.c.l.b16 %v70
  %v418 = vunpack.c.h.b16 %v70
  %v419 = vunpack.c.l.b16 %v71
  %v420 = vunpack.c.h.b16 %v71
  %v421 = vunpack.c.l.b16 %v72
  %v422 = vunpack.c.h.b16 %v72
  %v423 = vunpack.c.l.b16 %v73
  %v424 = vunpack.c.h.b16 %v73
  %v425 = vunpack.c.l.b16 %v74
  %v426 = vunpack.c.h.b16 %v74
  %v427 = vunpack.c.l.b16 %v75
  %v428 = vunpack.c.h.b16 %v75
  %v429 = vunpack.c.l.b16 %v76
  %v430 = vunpack.c.h.b16 %v76
  %v431 = vunpack.c.l.b16 %v77
  %v432 = vunpack.c.h.b16 %v77
  %v433 = vunpack.c.l.b16 %v78
  %v434 = vunpack.c.h.b16 %v78
  %v435 = vunpack.c.l.b16 %v79
  %v436 = vunpack.c.h.b16 %v79
  %v437 = vunpack.c.l.b16 %v80
  %v438 = vunpack.c.h.b16 %v80
  %v439 = vunpack.c.l.b16 %v81
  %v440 = vunpack.c.h.b16 %v81
  %v441 = vunpack.c.l.b16 %v82
  %v442 = vunpack.c.h.b16 %v82
  %v443 = vunpack.c.l.b16 %v83
  %v444 = vunpack.c.h.b16 %v83
  %v445 = vunpack.c.l.b16 %v84
  %v446 = vunpack.c.h.b16 %v84
  %v447 = vunpack.c.l.b16 %v85
  %v448 = vunpack.c.h.b16 %v85
  %v449 = vunpack.c.l.b16 %v86
  %v450 = vunpack.c.h.b16 %v86
  %v451 = vunpack.c.l.b16 %v87
  %v452 = vunpack.c.h.b16 %v87
  %v453 = vunpack.c.l.b16 %v88
  %v454 = vunpack.c.h.b16 %v88
  %v455 = vunpack.c.l.b16 %v89
  %v456 = vunpack.c.h.b16 %v89
  %v457 = vunpack.c.l.b16 %v90
  %v458 = vunpack.c.h.b16 %v90
  %v459 = vunpack.c.l.b16 %v91
  %v460 = vunpack.c.h.b16 %v91
  %v461 = vunpack.c.l.b16 %v92
  %v462 = vunpack.c.h.b16 %v92
  %v463 = vunpack.c.l.b16 %v93
  %v464 = vunpack.c.h.b16 %v93
  %v465 = vunpack.c.l.b16 %v94
  %v466 = vunpack.c.h.b16 %v94
  %v467 = vunpack.c.l.b16 %v95
  %v468 = vunpack.c.h.b16 %v95
  %v469 = vunpack.c.l.b16 %v96
  %v470 = vunpack.c.h.b16 %v96
  %v471 = vunpack.c.l.b16 %v97
  %v472 = vunpack.c.h.b16 %v97
  %v473 = vunpack.c.l.b16 %v98
  %v474 = vunpack.c.h.b16 %v98
  %v475 = vunpack.c.l.b16 %v99
  %v476 = vunpack.c.h.b16 %v99
  %v477 = vunpack.c.l.b16 %v100
  %v478 = vunpack.c.h.b16 %v100
  %v479 = vunpack.c.l.b16 %v101
  %v480 = vunpack.c.h.b16 %v101
  %v481 = vunpack.c.l.b16 %v102
  %v482 = vunpack.c.h.b16 %v102
  %v483 = vunpack.c.l.b16 %v103
  %v484 = vunpack.c.h.b16 %v103
  %v485 = vunpack.c.l.b16 %v104
  %v486 = vunpack.c.h.b16 %v104
  %v487 = vunpack.c.l.b16 %v105
  %v488 = vunpack.c.h.b16 %v105
  %v489 = vunpack.c.l.b16 %v106
  %v490 = vunpack.c.h.b16 %v106
  %v491 = vunpack.c.l.b16 %v107
  %v492 = vunpack.c.h.b16 %v107
  %v493 = vunpack.c.l.b16 %v108
  %v494 = vunpack.c.h.b16 %v108
  %v495 = vunpack.c.l.b16 %v109
  %v496 = vunpack.c.h.b16 %v109
  %v497 = vunpack.c.l.b16 %v110
  %v498 = vunpack.c.h.b16 %v110
  %v499 = vunpack.c.l.b16 %v111
  %v500 = vunpack.c.h.b16 %v111
  %v501 = vunpack.c.l.b16 %v112
  %v502 = vunpack.c.h.b16 %v112
  %v503 = vunpack.c.l.b16 %v113
  %v504 = vunpack.c.h.b16 %v113
  %v505 = vunpack.c.l.b16 %v114
  %v506 = vunpack.c.h.b16 %v114
  %v507 = vunpack.c.l.b16 %v115
  %v508 = vunpack.c.h.b16 %v115
  %v509 = vunpack.c.l.b16 %v116
  %v510 = vunpack.c.h.b16 %v116
  %v511 = vunpack.c.l.b16 %v117
  %v512 = vunpack.c.h.b16 %v117
  %v513 = vunpack.c.l.b16 %v118
  %v514 = vunpack.c.h.b16 %v118
  %v515 = vunpack.c.l.b16 %v119
  %v516 = vunpack.c.h.b16 %v119
  %v517 = vunpack.c.l.b16 %v120
  %v518 = vunpack.c.h.b16 %v120
  %v519 = vunpack.c.l.b16 %v121
  %v520 = vunpack.c.h.b16 %v121
  %v521 = vunpack.c.l.b16 %v122
  %v522 = vunpack.c.h.b16 %v122
  %v523 = vunpack.c.l.b16 %v123
  %v524 = vunpack.c.h.b16 %v123
  %v525 = vunpack.c.l.b16 %v124
  %v526 = vunpack.c.h.b16 %v124
  %v527 = vunpack.c.l.b16 %v125
  %v528 = vunpack.c.h.b16 %v125
  %v529 = vunpack.c.l.b16 %v126
  %v530 = vunpack.c.h.b16 %v126
  %v531 = vunpack.c.l.b16 %v127
  %v532 = vunpack.c.h.b16 %v127
  %v533 = vunpack.c.l.b16 %v128
  %v534 = vunpack.c.h.b16 %v128
  %v535 = vunpack.c.l.b16 %v129
  %v536 = vunpack.c.h.b16 %v129
  %v537 = vunpack.c.l.b16 %v130
  %v538 = vunpack.c.h.b16 %v130
  %v539 = vunpack.c.l.b16 %v131
  %v540 = vunpack.c.h.b16 %v131
  %v541 = vunpack.c.l.b16 %v132
  %v542 = vunpack.c.h.b16 %v132
  %v543 = vunpack.c.l.b16 %v133
  %v544 = vunpack.c.h.b16 %v133
  %v545 = vunpack.c.l.b16 %v134
  %v546 = vunpack.c.h.b16 %v134
  %v547 = vunpack.c.l.b16 %v135
  %v548 = vunpack.c.h.b16 %v135
  %v549 = vunpack.c.l.b16 %v136
  %v550 = vunpack.c.h.b16 %v136
  %v551 = vunpack.c.l.b16 %v137
  %v552 = vunpack.c.h.b16 %v137
  %v553 = vunpack.c.l.b16 %v138
  %v554 = vunpack.c.h.b16 %v138
  %v555 = vunpack.c.l.b16 %v139
  %v556 = vunpack.c.h.b16 %v139
  %v557 = vunpack.c.l.b16 %v140
  %v558 = vunpack.c.h.b16 %v140
  %v559 = vunpack.c.l.b16 %v141
  %v560 = vunpack.c.h.b16 %v141
  %v561 = vunpack.c.l.b16 %v142
  %v562 = vunpack.c.h.b16 %v142
  %v563 = vunpack.c.l.b16 %v143
  %v564 = vunpack.c.h.b16 %v143
  %v565 = vunpack.c.l.b16 %v144
  %v566 = vunpack.c.h.b16 %v144
  %v567 = vunpack.c.l.b16 %v145
  %v568 = vunpack.c.h.b16 %v145
  %v569 = vunpack.c.l.b16 %v146
  %v570 = vunpack.c.h.b16 %v146
  %v571 = vpack.c.b16 %v319, %v315
  %v572 = vpack.c.b16 %v320, %v316
  %v573 = vpack.c.b16 %v321, %v317
  %v574 = vpack.c.b16 %v322, %v318
  %v575 = vpack.c.b16 %v327, %v323
  %v576 = vpack.c.b16 %v328, %v324
  %v577 = vpack.c.b16 %v329, %v325
  %v578 = vpack.c.b16 %v330, %v326
  %v579 = vpack.c.b16 %v335, %v331
  %v580 = vpack.c.b16 %v336, %v332
  %v581 = vpack.c.b16 %v337, %v333
  %v582 = vpack.c.b16 %v338, %v334
  %v583 = vpack.c.b16 %v343, %v339
  %v584 = vpack.c.b16 %v344, %v340
  %v585 = vpack.c.b16 %v345, %v341
  %v586 = vpack.c.b16 %v346, %v342
  %v587 = vpack.c.b16 %v351, %v347
  %v588 = vpack.c.b16 %v352, %v348
  %v589 = vpack.c.b16 %v353, %v349
  %v590 = vpack.c.b16 %v354, %v350
  %v591 = vpack.c.b16 %v359, %v355
  %v592 = vpack.c.b16 %v360, %v356
  %v593 = vpack.c.b16 %v361, %v357
  %v594 = vpack.c.b16 %v362, %v358
  %v595 = vpack.c.b16 %v367, %v363
  %v596 = vpack.c.b16 %v368, %v364
  %v597 = vpack.c.b16 %v369, %v365
  %v598 = vpack.c.b16 %v370, %v366
  %v599 = vpack.c.b16 %v375, %v371
  %v600 = vpack.c.b16 %v376, %v372
  %v601 = vpack.c.b16 %v377, %v373
  %v602 = vpack.c.b16 %v378, %v374
  %v603 = vpack.c.b16 %v383, %v379
  %v604 = vpack.c.b16 %v384, %v380
  %v605 = vpack.c.b16 %v385, %v381
  %v606 = vpack.c.b16 %v386, %v382
  %v607 = vpack.c.b16 %v391, %v387
  %v608 = vpack.c.b16 %v392, %v388
  %v609 = vpack.c.b16 %v393, %v389
  %v610 = vpack.c.b16 %v394, %v390
  %v611 = vpack.c.b16 %v399, %v395
  %v612 = vpack.c.b16 %v400, %v396
  %v613 = vpack.c.b16 %v401, %v397
  %v614 = vpack.c.b16 %v402, %v398
  %v615 = vpack.c.b16 %v407, %v403
  %v616 = vpack.c.b16 %v408, %v404
  %v617 = vpack.c.b16 %v409, %v405
  %v618 = vpack.c.b16 %v410, %v406
  %v619 = vpack.c.b16 %v415, %v411
  %v620 = vpack.c.b16 %v416, %v412
  %v621 = vpack.c.b16 %v417, %v413
  %v622 = vpack.c.b16 %v418, %v414
  %v623 = vpack.c.b16 %v423, %v419
  %v624 = vpack.c.b16 %v424, %v420
  %v625 = vpack.c.b16 %v425, %v421
  %v626 = vpack.c.b16 %v426, %v422
  %v627 = vpack.c.b16 %v431, %v427
  %v628 = vpack.c.b16 %v432, %v428
  %v629 = vpack.c.b16 %v433, %v429
  %v630 = vpack.c.b16 %v434, %v430
  %v631 = vpack.c.b16 %v439, %v435
  %v632 = vpack.c.b16 %v440, %v436
  %v633 = vpack.c.b16 %v441, %v437
  %v634 = vpack.c.b16 %v442, %v438
  %v635 = vpack.c.b16 %v447, %v443
  %v636 = vpack.c.b16 %v448, %v444
  %v637 = vpack.c.b16 %v449, %v445
  %v638 = vpack.c.b16 %v450, %v446
  %v639 = vpack.c.b16 %v455, %v451
  %v640 = vpack.c.b16 %v456, %v452
  %v641 = vpack.c.b16 %v457, %v453
  %v642 = vpack.c.b16 %v458, %v454
  %v643 = vpack.c.b16 %v463, %v459
  %v644 = vpack.c.b16 %v464, %v460
  %v645 = vpack.c.b16 %v465, %v461
  %v646 = vpack.c.b16 %v466, %v462
  %v647 = vpack.c.b16 %v471, %v467
  %v648 = vpack.c.b16 %v472, %v468
  %v649 = vpack.c.b16 %v473, %v469
  %v650 = vpack.c.b16 %v474, %v470
  %v651 = vpack.c.b16 %v479, %v475
  %v652 = vpack.c.b16 %v480, %v476
  %v653 = vpack.c.b16 %v481, %v477
  %v654 = vpack.c.b16 %v482, %v478
  %v655 = vpack.c.b16 %v487, %v483
  %v656 = vpack.c.b16 %v488, %v484
  %v657 = vpack.c.b16 %v489, %v485
  %v658 = vpack.c.b16 %v490, %v486
  %v659 = vpack.c.b16 %v495, %v491
  %v660 = vpack.c.b16 %v496, %v492
  %v661 = vpack.c.b16 %v497, %v493
  %v662 = vpack.c.b16 %v498, %v494
  %v663 = vpack.c.b16 %v503, %v499
  %v664 = vpack.c.b16 %v504, %v500
  %v665 = vpack.c.b16 %v505, %v501
  %v666 = vpack.c.b16 %v506, %v502
  %v667 = vpack.c.b16 %v511, %v507
  %v668 = vpack.c.b16 %v512, %v508
  %v669 = vpack.c.b16 %v513, %v509
  %v670 = vpack.c.b16 %v514, %v510
  %v671 = vpack.c.b16 %v519, %v515
  %v672 = vpack.c.b16 %v520, %v516
  %v673 = vpack.c.b16 %v521, %v517
  %v674 = vpack.c.b16 %v522, %v518
  %v675 = vpack.c.b16 %v527, %v523
  %v676 = vpack.c.b16 %v528, %v524
  %v677 = vpack.c.b16 %v529, %v525
  %v678 = vpack.c.b16 %v530, %v526
  %v679 = vpack.c.b16 %v535, %v531
  %v680 = vpack.c.b16 %v536, %v532
  %v681 = vpack.c.b16 %v537, %v533
  %v682 = vpack.c.b16 %v538, %v534
  %v683 = vpack.c.b16 %v543, %v539
  %v684 = vpack.c.b16 %v544, %v540
  %v685 = vpack.c.b16 %v545, %v541
  %v686 = vpack.c.b16 %v546, %v542
  %v687 = vpack.c.b16 %v551, %v547
  %v688 = vpack.c.b16 %v552, %v548
  %v689 = vpack.c.b16 %v553, %v549
  %v690 = vpack.c.b16 %v554, %v550
  %v691 = vpack.c.b16 %v559, %v555
  %v692 = vpack.c.b16 %v560, %v556
  %v693 = vpack.c.b16 %v561, %v557
  %v694 = vpack.c.b16 %v562, %v558
  %v695 = vpack.c.b16 %v567, %v563
  %v696 = vpack.c.b16 %v568, %v564
  %v697 = vpack.c.b16 %v569, %v565
  %v698 = vpack.c.b16 %v570, %v566
  %827 = vmatprep.subr.bf16.mxu0 %v572
  %828 = vmatpush1.bf16.msra.mxu0 %v571
  %829 = vmatprep.subr.bf16.mxu0 %v576
  %830 = vmatpush1.bf16.msra.mxu0 %v575
  %831 = vmatprep.subr.bf16.mxu0 %v580
  %832 = vmatpush1.bf16.msra.mxu0 %v579
  %833 = vmatprep.subr.bf16.mxu0 %v584
  %834 = vmatpush1.bf16.msra.mxu0 %v583
  %835 = vmatprep.subr.bf16.mxu0 %v588
  %836 = vmatpush1.bf16.msra.mxu0 %v587
  %837 = vmatprep.subr.bf16.mxu0 %v592
  %838 = vmatpush1.bf16.msra.mxu0 %v591
  %839 = vmatprep.subr.bf16.mxu0 %v596
  %840 = vmatpush1.bf16.msra.mxu0 %v595
  %841 = vmatprep.subr.bf16.mxu0 %v600
  %842 = vmatpush1.bf16.msra.mxu0 %v599
  %843 = vmatprep.subr.bf16.mxu0 %v604
  %844 = vmatpush1.bf16.msra.mxu0 %v603
  %845 = vmatprep.subr.bf16.mxu0 %v608
  %846 = vmatpush1.bf16.msra.mxu0 %v607
  %847 = vmatprep.subr.bf16.mxu0 %v612
  %848 = vmatpush1.bf16.msra.mxu0 %v611
  %849 = vmatprep.subr.bf16.mxu0 %v616
  %850 = vmatpush1.bf16.msra.mxu0 %v615
  %851 = vmatprep.subr.bf16.mxu0 %v620
  %852 = vmatpush1.bf16.msra.mxu0 %v619
  %853 = vmatprep.subr.bf16.mxu0 %v624
  %854 = vmatpush1.bf16.msra.mxu0 %v623
  %855 = vmatprep.subr.bf16.mxu0 %v628
  %856 = vmatpush1.bf16.msra.mxu0 %v627
  %857 = vmatprep.subr.bf16.mxu0 %v632
  %858 = vmatpush1.bf16.msra.mxu0 %v631
  %859 = vmatprep.mubr.bf16.mxu0 %v172
  %860 = vmatmul.mubr.bf16.gmra.mrb[0].mxu0 %v171
  %v861 = vpop.f32.mrb[0].mxu0
  %v862 = vadd.f32 0.0, %v861
  %v863 = vpop.f32.mrb[0].mxu0
  %v864 = vadd.f32 0.0, %v863
  %v865 = vpop.f32.mrb[0].mxu0
  %v866 = vadd.f32 0.0, %v865
  %v867 = vpop.f32.mrb[0].mxu0
  %v868 = vadd.f32 0.0, %v867
  %869 = vmatprep.mubr.bf16.mxu0 %v176
  %870 = vmatmul.mubr.bf16.gmra.mrb[0].mxu0 %v175
  %v871 = vpop.f32.mrb[0].mxu0
  %v872 = vadd.f32 0.0, %v871
  %v873 = vpop.f32.mrb[0].mxu0
  %v874 = vadd.f32 0.0, %v873
  %v875 = vpop.f32.mrb[0].mxu0
  %v876 = vadd.f32 0.0, %v875
  %v877 = vpop.f32.mrb[0].mxu0
  %v878 = vadd.f32 0.0, %v877
  %879 = vdwg.mxu0
  %880 = vmatprep.subr.bf16.mxu0 %v636
  %881 = vmatpush1.bf16.msra.mxu0 %v635
  %882 = vmatprep.subr.bf16.mxu0 %v640
  %883 = vmatpush1.bf16.msra.mxu0 %v639
  %884 = vmatprep.subr.bf16.mxu0 %v644
  %885 = vmatpush1.bf16.msra.mxu0 %v643
  %886 = vmatprep.subr.bf16.mxu0 %v648
  %887 = vmatpush1.bf16.msra.mxu0 %v647
  %888 = vmatprep.subr.bf16.mxu0 %v652
  %889 = vmatpush1.bf16.msra.mxu0 %v651
  %890 = vmatprep.subr.bf16.mxu0 %v656
  %891 = vmatpush1.bf16.msra.mxu0 %v655
  %892 = vmatprep.subr.bf16.mxu0 %v660
  %893 = vmatpush1.bf16.msra.mxu0 %v659
  %894 = vmatprep.subr.bf16.mxu0 %v664
  %895 = vmatpush1.bf16.msra.mxu0 %v663
  %896 = vmatprep.subr.bf16.mxu0 %v668
  %897 = vmatpush1.bf16.msra.mxu0 %v667
  %898 = vmatprep.subr.bf16.mxu0 %v672
  %899 = vmatpush1.bf16.msra.mxu0 %v671
  %900 = vmatprep.subr.bf16.mxu0 %v676
  %901 = vmatpush1.bf16.msra.mxu0 %v675
  %902 = vmatprep.subr.bf16.mxu0 %v680
  %903 = vmatpush1.bf16.msra.mxu0 %v679
  %904 = vmatprep.subr.bf16.mxu0 %v684
  %905 = vmatpush1.bf16.msra.mxu0 %v683
  %906 = vmatprep.subr.bf16.mxu0 %v688
  %907 = vmatpush1.bf16.msra.mxu0 %v687
  %908 = vmatprep.subr.bf16.mxu0 %v692
  %909 = vmatpush1.bf16.msra.mxu0 %v691
  %910 = vmatprep.subr.bf16.mxu0 %v696
  %911 = vmatpush1.bf16.msra.mxu0 %v695
  %912 = vmatprep.mubr.bf16.mxu0 %v174
  %913 = vmatmul.mubr.bf16.gmra.mrb[0].mxu0 %v173
  %v914 = vpop.f32.mrb[0].mxu0
  %v915 = vadd.f32 %v862, %v914
  %v916 = vpop.f32.mrb[0].mxu0
  %v917 = vadd.f32 %v864, %v916
  %v918 = vpop.f32.mrb[0].mxu0
  %v919 = vadd.f32 %v866, %v918
  %v920 = vpop.f32.mrb[0].mxu0
  %v921 = vadd.f32 %v868, %v920
  %922 = vmatprep.mubr.bf16.mxu0 %v178
  %923 = vmatmul.mubr.bf16.gmra.mrb[0].mxu0 %v177
  %v924 = vpop.f32.mrb[0].mxu0
  %v925 = vadd.f32 %v872, %v924
  %v926 = vpop.f32.mrb[0].mxu0
  %v927 = vadd.f32 %v874, %v926
  %v928 = vpop.f32.mrb[0].mxu0
  %v929 = vadd.f32 %v876, %v928
  %v930 = vpop.f32.mrb[0].mxu0
  %v931 = vadd.f32 %v878, %v930
  %932 = vdwg.mxu0
  %933 = vmatprep.subr.bf16.mxu0 %v574
  %934 = vmatpush1.bf16.msra.mxu0 %v573
  %935 = vmatprep.subr.bf16.mxu0 %v578
  %936 = vmatpush1.bf16.msra.mxu0 %v577
  %937 = vmatprep.subr.bf16.mxu0 %v582
  %938 = vmatpush1.bf16.msra.mxu0 %v581
  %939 = vmatprep.subr.bf16.mxu0 %v586
  %940 = vmatpush1.bf16.msra.mxu0 %v585
  %941 = vmatprep.subr.bf16.mxu0 %v590
  %942 = vmatpush1.bf16.msra.mxu0 %v589
  %943 = vmatprep.subr.bf16.mxu0 %v594
  %944 = vmatpush1.bf16.msra.mxu0 %v593
  %945 = vmatprep.subr.bf16.mxu0 %v598
  %946 = vmatpush1.bf16.msra.mxu0 %v597
  %947 = vmatprep.subr.bf16.mxu0 %v602
  %948 = vmatpush1.bf16.msra.mxu0 %v601
  %949 = vmatprep.subr.bf16.mxu0 %v606
  %950 = vmatpush1.bf16.msra.mxu0 %v605
  %951 = vmatprep.subr.bf16.mxu0 %v610
  %952 = vmatpush1.bf16.msra.mxu0 %v609
  %953 = vmatprep.subr.bf16.mxu0 %v614
  %954 = vmatpush1.bf16.msra.mxu0 %v613
  %955 = vmatprep.subr.bf16.mxu0 %v618
  %956 = vmatpush1.bf16.msra.mxu0 %v617
  %957 = vmatprep.subr.bf16.mxu0 %v622
  %958 = vmatpush1.bf16.msra.mxu0 %v621
  %959 = vmatprep.subr.bf16.mxu0 %v626
  %960 = vmatpush1.bf16.msra.mxu0 %v625
  %961 = vmatprep.subr.bf16.mxu0 %v630
  %962 = vmatpush1.bf16.msra.mxu0 %v629
  %963 = vmatprep.subr.bf16.mxu0 %v634
  %964 = vmatpush1.bf16.msra.mxu0 %v633
  %965 = vmatprep.mubr.bf16.mxu0 %v172
  %966 = vmatmul.mubr.bf16.gmra.mrb[0].mxu0 %v171
  %v967 = vpop.f32.mrb[0].mxu0
  %v968 = vadd.f32 0.0, %v967
  %v969 = vpop.f32.mrb[0].mxu0
  %v970 = vadd.f32 0.0, %v969
  %v971 = vpop.f32.mrb[0].mxu0
  %v972 = vadd.f32 0.0, %v971
  %v973 = vpop.f32.mrb[0].mxu0
  %v974 = vadd.f32 0.0, %v973
  %975 = vmatprep.mubr.bf16.mxu0 %v176
  %976 = vmatmul.mubr.bf16.gmra.mrb[0].mxu0 %v175
  %v977 = vpop.f32.mrb[0].mxu0
  %v978 = vadd.f32 0.0, %v977
  %v979 = vpop.f32.mrb[0].mxu0
  %v980 = vadd.f32 0.0, %v979
  %v981 = vpop.f32.mrb[0].mxu0
  %v982 = vadd.f32 0.0, %v981
  %v983 = vpop.f32.mrb[0].mxu0
  %v984 = vadd.f32 0.0, %v983
  %985 = vdwg.mxu0
  %986 = vmatprep.subr.bf16.mxu0 %v638
  %987 = vmatpush1.bf16.msra.mxu0 %v637
  %988 = vmatprep.subr.bf16.mxu0 %v642
  %989 = vmatpush1.bf16.msra.mxu0 %v641
  %990 = vmatprep.subr.bf16.mxu0 %v646
  %991 = vmatpush1.bf16.msra.mxu0 %v645
  %992 = vmatprep.subr.bf16.mxu0 %v650
  %993 = vmatpush1.bf16.msra.mxu0 %v649
  %994 = vmatprep.subr.bf16.mxu0 %v654
  %995 = vmatpush1.bf16.msra.mxu0 %v653
  %996 = vmatprep.subr.bf16.mxu0 %v658
  %997 = vmatpush1.bf16.msra.mxu0 %v657
  %998 = vmatprep.subr.bf16.mxu0 %v662
  %999 = vmatpush1.bf16.msra.mxu0 %v661
  %1000 = vmatprep.subr.bf16.mxu0 %v666
  %1001 = vmatpush1.bf16.msra.mxu0 %v665
  %1002 = vmatprep.subr.bf16.mxu0 %v670
  %1003 = vmatpush1.bf16.msra.mxu0 %v669
  %1004 = vmatprep.subr.bf16.mxu0 %v674
  %1005 = vmatpush1.bf16.msra.mxu0 %v673
  %1006 = vmatprep.subr.bf16.mxu0 %v678
  %1007 = vmatpush1.bf16.msra.mxu0 %v677
  %1008 = vmatprep.subr.bf16.mxu0 %v682
  %1009 = vmatpush1.bf16.msra.mxu0 %v681
  %1010 = vmatprep.subr.bf16.mxu0 %v686
  %1011 = vmatpush1.bf16.msra.mxu0 %v685
  %1012 = vmatprep.subr.bf16.mxu0 %v690
  %1013 = vmatpush1.bf16.msra.mxu0 %v689
  %1014 = vmatprep.subr.bf16.mxu0 %v694
  %1015 = vmatpush1.bf16.msra.mxu0 %v693
  %1016 = vmatprep.subr.bf16.mxu0 %v698
  %1017 = vmatpush1.bf16.msra.mxu0 %v697
  %1018 = vmatprep.mubr.bf16.mxu0 %v174
  %1019 = vmatmul.mubr.bf16.gmra.mrb[0].mxu0 %v173
  %v1020 = vpop.f32.mrb[0].mxu0
  %v1021 = vadd.f32 %v968, %v1020
  %v1022 = vpop.f32.mrb[0].mxu0
  %v1023 = vadd.f32 %v970, %v1022
  %v1024 = vpop.f32.mrb[0].mxu0
  %v1025 = vadd.f32 %v972, %v1024
  %v1026 = vpop.f32.mrb[0].mxu0
  %v1027 = vadd.f32 %v974, %v1026
  %1028 = vmatprep.mubr.bf16.mxu0 %v178
  %1029 = vmatmul.mubr.bf16.gmra.mrb[0].mxu0 %v177
  %v1030 = vpop.f32.mrb[0].mxu0
  %v1031 = vadd.f32 %v978, %v1030
  %v1032 = vpop.f32.mrb[0].mxu0
  %v1033 = vadd.f32 %v980, %v1032
  %v1034 = vpop.f32.mrb[0].mxu0
  %v1035 = vadd.f32 %v982, %v1034
  %v1036 = vpop.f32.mrb[0].mxu0
  %v1037 = vadd.f32 %v984, %v1036
  %1038 = vdwg.mxu0
  %v1039 = vld [vmem:[%s1 + $0x400] sm:$0xff]
  %v1040 = vld [vmem:[%s1 + $0x408] sm:$0xff]
  %v1041 = vld [vmem:[%s1 + $0x410] sm:$0xff]
  %v1042 = vld [vmem:[%s1 + $0x418] sm:$0xff]
  %v1043 = vld [vmem:[%s1 + $0x420] sm:$0xff]
  %v1044 = vld [vmem:[%s1 + $0x428] sm:$0xff]
  %v1045 = vld [vmem:[%s1 + $0x430] sm:$0xff]
  %v1046 = vld [vmem:[%s1 + $0x438] sm:$0xff]
  %v1047 = vld [vmem:[%s1 + $0x440] sm:$0xff]
  %v1048 = vld [vmem:[%s1 + $0x448] sm:$0xff]
  %v1049 = vld [vmem:[%s1 + $0x450] sm:$0xff]
  %v1050 = vld [vmem:[%s1 + $0x458] sm:$0xff]
  %v1051 = vld [vmem:[%s1 + $0x460] sm:$0xff]
  %v1052 = vld [vmem:[%s1 + $0x468] sm:$0xff]
  %v1053 = vld [vmem:[%s1 + $0x470] sm:$0xff]
  %v1054 = vld [vmem:[%s1 + $0x478] sm:$0xff]
  %v1055 = vld [vmem:[%s1 + $0x480] sm:$0xff]
  %v1056 = vld [vmem:[%s1 + $0x488] sm:$0xff]
  %v1057 = vld [vmem:[%s1 + $0x490] sm:$0xff]
  %v1058 = vld [vmem:[%s1 + $0x498] sm:$0xff]
  %v1059 = vld [vmem:[%s1 + $0x4a0] sm:$0xff]
  %v1060 = vld [vmem:[%s1 + $0x4a8] sm:$0xff]
  %v1061 = vld [vmem:[%s1 + $0x4b0] sm:$0xff]
  %v1062 = vld [vmem:[%s1 + $0x4b8] sm:$0xff]
  %v1063 = vld [vmem:[%s1 + $0x4c0] sm:$0xff]
  %v1064 = vld [vmem:[%s1 + $0x4c8] sm:$0xff]
  %v1065 = vld [vmem:[%s1 + $0x4d0] sm:$0xff]
  %v1066 = vld [vmem:[%s1 + $0x4d8] sm:$0xff]
  %v1067 = vld [vmem:[%s1 + $0x4e0] sm:$0xff]
  %v1068 = vld [vmem:[%s1 + $0x4e8] sm:$0xff]
  %v1069 = vld [vmem:[%s1 + $0x4f0] sm:$0xff]
  %v1070 = vld [vmem:[%s1 + $0x4f8] sm:$0xff]
  %v1071 = vld [vmem:[%s1 + $0x500] sm:$0xff]
  %v1072 = vld [vmem:[%s1 + $0x508] sm:$0xff]
  %v1073 = vld [vmem:[%s1 + $0x510] sm:$0xff]
  %v1074 = vld [vmem:[%s1 + $0x518] sm:$0xff]
  %v1075 = vld [vmem:[%s1 + $0x520] sm:$0xff]
  %v1076 = vld [vmem:[%s1 + $0x528] sm:$0xff]
  %v1077 = vld [vmem:[%s1 + $0x530] sm:$0xff]
  %v1078 = vld [vmem:[%s1 + $0x538] sm:$0xff]
  %v1079 = vld [vmem:[%s1 + $0x540] sm:$0xff]
  %v1080 = vld [vmem:[%s1 + $0x548] sm:$0xff]
  %v1081 = vld [vmem:[%s1 + $0x550] sm:$0xff]
  %v1082 = vld [vmem:[%s1 + $0x558] sm:$0xff]
  %v1083 = vld [vmem:[%s1 + $0x560] sm:$0xff]
  %v1084 = vld [vmem:[%s1 + $0x568] sm:$0xff]
  %v1085 = vld [vmem:[%s1 + $0x570] sm:$0xff]
  %v1086 = vld [vmem:[%s1 + $0x578] sm:$0xff]
  %v1087 = vld [vmem:[%s1 + $0x580] sm:$0xff]
  %v1088 = vld [vmem:[%s1 + $0x588] sm:$0xff]
  %v1089 = vld [vmem:[%s1 + $0x590] sm:$0xff]
  %v1090 = vld [vmem:[%s1 + $0x598] sm:$0xff]
  %v1091 = vld [vmem:[%s1 + $0x5a0] sm:$0xff]
  %v1092 = vld [vmem:[%s1 + $0x5a8] sm:$0xff]
  %v1093 = vld [vmem:[%s1 + $0x5b0] sm:$0xff]
  %v1094 = vld [vmem:[%s1 + $0x5b8] sm:$0xff]
  %v1095 = vld [vmem:[%s1 + $0x5c0] sm:$0xff]
  %v1096 = vld [vmem:[%s1 + $0x5c8] sm:$0xff]
  %v1097 = vld [vmem:[%s1 + $0x5d0] sm:$0xff]
  %v1098 = vld [vmem:[%s1 + $0x5d8] sm:$0xff]
  %v1099 = vld [vmem:[%s1 + $0x5e0] sm:$0xff]
  %v1100 = vld [vmem:[%s1 + $0x5e8] sm:$0xff]
  %v1101 = vld [vmem:[%s1 + $0x5f0] sm:$0xff]
  %v1102 = vld [vmem:[%s1 + $0x5f8] sm:$0xff]
  %v1103 = vld [vmem:[%s1 + $0x600] sm:$0xff]
  %v1104 = vld [vmem:[%s1 + $0x608] sm:$0xff]
  %v1105 = vld [vmem:[%s1 + $0x610] sm:$0xff]
  %v1106 = vld [vmem:[%s1 + $0x618] sm:$0xff]
  %v1107 = vld [vmem:[%s1 + $0x620] sm:$0xff]
  %v1108 = vld [vmem:[%s1 + $0x628] sm:$0xff]
  %v1109 = vld [vmem:[%s1 + $0x630] sm:$0xff]
  %v1110 = vld [vmem:[%s1 + $0x638] sm:$0xff]
  %v1111 = vld [vmem:[%s1 + $0x640] sm:$0xff]
  %v1112 = vld [vmem:[%s1 + $0x648] sm:$0xff]
  %v1113 = vld [vmem:[%s1 + $0x650] sm:$0xff]
  %v1114 = vld [vmem:[%s1 + $0x658] sm:$0xff]
  %v1115 = vld [vmem:[%s1 + $0x660] sm:$0xff]
  %v1116 = vld [vmem:[%s1 + $0x668] sm:$0xff]
  %v1117 = vld [vmem:[%s1 + $0x670] sm:$0xff]
  %v1118 = vld [vmem:[%s1 + $0x678] sm:$0xff]
  %v1119 = vld [vmem:[%s1 + $0x680] sm:$0xff]
  %v1120 = vld [vmem:[%s1 + $0x688] sm:$0xff]
  %v1121 = vld [vmem:[%s1 + $0x690] sm:$0xff]
  %v1122 = vld [vmem:[%s1 + $0x698] sm:$0xff]
  %v1123 = vld [vmem:[%s1 + $0x6a0] sm:$0xff]
  %v1124 = vld [vmem:[%s1 + $0x6a8] sm:$0xff]
  %v1125 = vld [vmem:[%s1 + $0x6b0] sm:$0xff]
  %v1126 = vld [vmem:[%s1 + $0x6b8] sm:$0xff]
  %v1127 = vld [vmem:[%s1 + $0x6c0] sm:$0xff]
  %v1128 = vld [vmem:[%s1 + $0x6c8] sm:$0xff]
  %v1129 = vld [vmem:[%s1 + $0x6d0] sm:$0xff]
  %v1130 = vld [vmem:[%s1 + $0x6d8] sm:$0xff]
  %v1131 = vld [vmem:[%s1 + $0x6e0] sm:$0xff]
  %v1132 = vld [vmem:[%s1 + $0x6e8] sm:$0xff]
  %v1133 = vld [vmem:[%s1 + $0x6f0] sm:$0xff]
  %v1134 = vld [vmem:[%s1 + $0x6f8] sm:$0xff]
  %v1135 = vld [vmem:[%s1 + $0x700] sm:$0xff]
  %v1136 = vld [vmem:[%s1 + $0x708] sm:$0xff]
  %v1137 = vld [vmem:[%s1 + $0x710] sm:$0xff]
  %v1138 = vld [vmem:[%s1 + $0x718] sm:$0xff]
  %v1139 = vld [vmem:[%s1 + $0x720] sm:$0xff]
  %v1140 = vld [vmem:[%s1 + $0x728] sm:$0xff]
  %v1141 = vld [vmem:[%s1 + $0x730] sm:$0xff]
  %v1142 = vld [vmem:[%s1 + $0x738] sm:$0xff]
  %v1143 = vld [vmem:[%s1 + $0x740] sm:$0xff]
  %v1144 = vld [vmem:[%s1 + $0x748] sm:$0xff]
  %v1145 = vld [vmem:[%s1 + $0x750] sm:$0xff]
  %v1146 = vld [vmem:[%s1 + $0x758] sm:$0xff]
  %v1147 = vld [vmem:[%s1 + $0x760] sm:$0xff]
  %v1148 = vld [vmem:[%s1 + $0x768] sm:$0xff]
  %v1149 = vld [vmem:[%s1 + $0x770] sm:$0xff]
  %v1150 = vld [vmem:[%s1 + $0x778] sm:$0xff]
  %v1151 = vld [vmem:[%s1 + $0x780] sm:$0xff]
  %v1152 = vld [vmem:[%s1 + $0x788] sm:$0xff]
  %v1153 = vld [vmem:[%s1 + $0x790] sm:$0xff]
  %v1154 = vld [vmem:[%s1 + $0x798] sm:$0xff]
  %v1155 = vld [vmem:[%s1 + $0x7a0] sm:$0xff]
  %v1156 = vld [vmem:[%s1 + $0x7a8] sm:$0xff]
  %v1157 = vld [vmem:[%s1 + $0x7b0] sm:$0xff]
  %v1158 = vld [vmem:[%s1 + $0x7b8] sm:$0xff]
  %v1159 = vld [vmem:[%s1 + $0x7c0] sm:$0xff]
  %v1160 = vld [vmem:[%s1 + $0x7c8] sm:$0xff]
  %v1161 = vld [vmem:[%s1 + $0x7d0] sm:$0xff]
  %v1162 = vld [vmem:[%s1 + $0x7d8] sm:$0xff]
  %v1163 = vld [vmem:[%s1 + $0x7e0] sm:$0xff]
  %v1164 = vld [vmem:[%s1 + $0x7e8] sm:$0xff]
  %v1165 = vld [vmem:[%s1 + $0x7f0] sm:$0xff]
  %v1166 = vld [vmem:[%s1 + $0x7f8] sm:$0xff]
  %v1295 = vunpack.c.l.b16 %v1039
  %v1296 = vunpack.c.h.b16 %v1039
  %v1297 = vunpack.c.l.b16 %v1040
  %v1298 = vunpack.c.h.b16 %v1040
  %v1299 = vunpack.c.l.b16 %v1041
  %v1300 = vunpack.c.h.b16 %v1041
  %v1301 = vunpack.c.l.b16 %v1042
  %v1302 = vunpack.c.h.b16 %v1042
  %v1303 = vunpack.c.l.b16 %v1043
  %v1304 = vunpack.c.h.b16 %v1043
  %v1305 = vunpack.c.l.b16 %v1044
  %v1306 = vunpack.c.h.b16 %v1044
  %v1307 = vunpack.c.l.b16 %v1045
  %v1308 = vunpack.c.h.b16 %v1045
  %v1309 = vunpack.c.l.b16 %v1046
  %v1310 = vunpack.c.h.b16 %v1046
  %v1311 = vunpack.c.l.b16 %v1047
  %v1312 = vunpack.c.h.b16 %v1047
  %v1313 = vunpack.c.l.b16 %v1048
  %v1314 = vunpack.c.h.b16 %v1048
  %v1315 = vunpack.c.l.b16 %v1049
  %v1316 = vunpack.c.h.b16 %v1049
  %v1317 = vunpack.c.l.b16 %v1050
  %v1318 = vunpack.c.h.b16 %v1050
  %v1319 = vunpack.c.l.b16 %v1051
  %v1320 = vunpack.c.h.b16 %v1051
  %v1321 = vunpack.c.l.b16 %v1052
  %v1322 = vunpack.c.h.b16 %v1052
  %v1323 = vunpack.c.l.b16 %v1053
  %v1324 = vunpack.c.h.b16 %v1053
  %v1325 = vunpack.c.l.b16 %v1054
  %v1326 = vunpack.c.h.b16 %v1054
  %v1327 = vunpack.c.l.b16 %v1055
  %v1328 = vunpack.c.h.b16 %v1055
  %v1329 = vunpack.c.l.b16 %v1056
  %v1330 = vunpack.c.h.b16 %v1056
  %v1331 = vunpack.c.l.b16 %v1057
  %v1332 = vunpack.c.h.b16 %v1057
  %v1333 = vunpack.c.l.b16 %v1058
  %v1334 = vunpack.c.h.b16 %v1058
  %v1335 = vunpack.c.l.b16 %v1059
  %v1336 = vunpack.c.h.b16 %v1059
  %v1337 = vunpack.c.l.b16 %v1060
  %v1338 = vunpack.c.h.b16 %v1060
  %v1339 = vunpack.c.l.b16 %v1061
  %v1340 = vunpack.c.h.b16 %v1061
  %v1341 = vunpack.c.l.b16 %v1062
  %v1342 = vunpack.c.h.b16 %v1062
  %v1343 = vunpack.c.l.b16 %v1063
  %v1344 = vunpack.c.h.b16 %v1063
  %v1345 = vunpack.c.l.b16 %v1064
  %v1346 = vunpack.c.h.b16 %v1064
  %v1347 = vunpack.c.l.b16 %v1065
  %v1348 = vunpack.c.h.b16 %v1065
  %v1349 = vunpack.c.l.b16 %v1066
  %v1350 = vunpack.c.h.b16 %v1066
  %v1351 = vunpack.c.l.b16 %v1067
  %v1352 = vunpack.c.h.b16 %v1067
  %v1353 = vunpack.c.l.b16 %v1068
  %v1354 = vunpack.c.h.b16 %v1068
  %v1355 = vunpack.c.l.b16 %v1069
  %v1356 = vunpack.c.h.b16 %v1069
  %v1357 = vunpack.c.l.b16 %v1070
  %v1358 = vunpack.c.h.b16 %v1070
  %v1359 = vunpack.c.l.b16 %v1071
  %v1360 = vunpack.c.h.b16 %v1071
  %v1361 = vunpack.c.l.b16 %v1072
  %v1362 = vunpack.c.h.b16 %v1072
  %v1363 = vunpack.c.l.b16 %v1073
  %v1364 = vunpack.c.h.b16 %v1073
  %v1365 = vunpack.c.l.b16 %v1074
  %v1366 = vunpack.c.h.b16 %v1074
  %v1367 = vunpack.c.l.b16 %v1075
  %v1368 = vunpack.c.h.b16 %v1075
  %v1369 = vunpack.c.l.b16 %v1076
  %v1370 = vunpack.c.h.b16 %v1076
  %v1371 = vunpack.c.l.b16 %v1077
  %v1372 = vunpack.c.h.b16 %v1077
  %v1373 = vunpack.c.l.b16 %v1078
  %v1374 = vunpack.c.h.b16 %v1078
  %v1375 = vunpack.c.l.b16 %v1079
  %v1376 = vunpack.c.h.b16 %v1079
  %v1377 = vunpack.c.l.b16 %v1080
  %v1378 = vunpack.c.h.b16 %v1080
  %v1379 = vunpack.c.l.b16 %v1081
  %v1380 = vunpack.c.h.b16 %v1081
  %v1381 = vunpack.c.l.b16 %v1082
  %v1382 = vunpack.c.h.b16 %v1082
  %v1383 = vunpack.c.l.b16 %v1083
  %v1384 = vunpack.c.h.b16 %v1083
  %v1385 = vunpack.c.l.b16 %v1084
  %v1386 = vunpack.c.h.b16 %v1084
  %v1387 = vunpack.c.l.b16 %v1085
  %v1388 = vunpack.c.h.b16 %v1085
  %v1389 = vunpack.c.l.b16 %v1086
  %v1390 = vunpack.c.h.b16 %v1086
  %v1391 = vunpack.c.l.b16 %v1087
  %v1392 = vunpack.c.h.b16 %v1087
  %v1393 = vunpack.c.l.b16 %v1088
  %v1394 = vunpack.c.h.b16 %v1088
  %v1395 = vunpack.c.l.b16 %v1089
  %v1396 = vunpack.c.h.b16 %v1089
  %v1397 = vunpack.c.l.b16 %v1090
  %v1398 = vunpack.c.h.b16 %v1090
  %v1399 = vunpack.c.l.b16 %v1091
  %v1400 = vunpack.c.h.b16 %v1091
  %v1401 = vunpack.c.l.b16 %v1092
  %v1402 = vunpack.c.h.b16 %v1092
  %v1403 = vunpack.c.l.b16 %v1093
  %v1404 = vunpack.c.h.b16 %v1093
  %v1405 = vunpack.c.l.b16 %v1094
  %v1406 = vunpack.c.h.b16 %v1094
  %v1407 = vunpack.c.l.b16 %v1095
  %v1408 = vunpack.c.h.b16 %v1095
  %v1409 = vunpack.c.l.b16 %v1096
  %v1410 = vunpack.c.h.b16 %v1096
  %v1411 = vunpack.c.l.b16 %v1097
  %v1412 = vunpack.c.h.b16 %v1097
  %v1413 = vunpack.c.l.b16 %v1098
  %v1414 = vunpack.c.h.b16 %v1098
  %v1415 = vunpack.c.l.b16 %v1099
  %v1416 = vunpack.c.h.b16 %v1099
  %v1417 = vunpack.c.l.b16 %v1100
  %v1418 = vunpack.c.h.b16 %v1100
  %v1419 = vunpack.c.l.b16 %v1101
  %v1420 = vunpack.c.h.b16 %v1101
  %v1421 = vunpack.c.l.b16 %v1102
  %v1422 = vunpack.c.h.b16 %v1102
  %v1423 = vunpack.c.l.b16 %v1103
  %v1424 = vunpack.c.h.b16 %v1103
  %v1425 = vunpack.c.l.b16 %v1104
  %v1426 = vunpack.c.h.b16 %v1104
  %v1427 = vunpack.c.l.b16 %v1105
  %v1428 = vunpack.c.h.b16 %v1105
  %v1429 = vunpack.c.l.b16 %v1106
  %v1430 = vunpack.c.h.b16 %v1106
  %v1431 = vunpack.c.l.b16 %v1107
  %v1432 = vunpack.c.h.b16 %v1107
  %v1433 = vunpack.c.l.b16 %v1108
  %v1434 = vunpack.c.h.b16 %v1108
  %v1435 = vunpack.c.l.b16 %v1109
  %v1436 = vunpack.c.h.b16 %v1109
  %v1437 = vunpack.c.l.b16 %v1110
  %v1438 = vunpack.c.h.b16 %v1110
  %v1439 = vunpack.c.l.b16 %v1111
  %v1440 = vunpack.c.h.b16 %v1111
  %v1441 = vunpack.c.l.b16 %v1112
  %v1442 = vunpack.c.h.b16 %v1112
  %v1443 = vunpack.c.l.b16 %v1113
  %v1444 = vunpack.c.h.b16 %v1113
  %v1445 = vunpack.c.l.b16 %v1114
  %v1446 = vunpack.c.h.b16 %v1114
  %v1447 = vunpack.c.l.b16 %v1115
  %v1448 = vunpack.c.h.b16 %v1115
  %v1449 = vunpack.c.l.b16 %v1116
  %v1450 = vunpack.c.h.b16 %v1116
  %v1451 = vunpack.c.l.b16 %v1117
  %v1452 = vunpack.c.h.b16 %v1117
  %v1453 = vunpack.c.l.b16 %v1118
  %v1454 = vunpack.c.h.b16 %v1118
  %v1455 = vunpack.c.l.b16 %v1119
  %v1456 = vunpack.c.h.b16 %v1119
  %v1457 = vunpack.c.l.b16 %v1120
  %v1458 = vunpack.c.h.b16 %v1120
  %v1459 = vunpack.c.l.b16 %v1121
  %v1460 = vunpack.c.h.b16 %v1121
  %v1461 = vunpack.c.l.b16 %v1122
  %v1462 = vunpack.c.h.b16 %v1122
  %v1463 = vunpack.c.l.b16 %v1123
  %v1464 = vunpack.c.h.b16 %v1123
  %v1465 = vunpack.c.l.b16 %v1124
  %v1466 = vunpack.c.h.b16 %v1124
  %v1467 = vunpack.c.l.b16 %v1125
  %v1468 = vunpack.c.h.b16 %v1125
  %v1469 = vunpack.c.l.b16 %v1126
  %v1470 = vunpack.c.h.b16 %v1126
  %v1471 = vunpack.c.l.b16 %v1127
  %v1472 = vunpack.c.h.b16 %v1127
  %v1473 = vunpack.c.l.b16 %v1128
  %v1474 = vunpack.c.h.b16 %v1128
  %v1475 = vunpack.c.l.b16 %v1129
  %v1476 = vunpack.c.h.b16 %v1129
  %v1477 = vunpack.c.l.b16 %v1130
  %v1478 = vunpack.c.h.b16 %v1130
  %v1479 = vunpack.c.l.b16 %v1131
  %v1480 = vunpack.c.h.b16 %v1131
  %v1481 = vunpack.c.l.b16 %v1132
  %v1482 = vunpack.c.h.b16 %v1132
  %v1483 = vunpack.c.l.b16 %v1133
  %v1484 = vunpack.c.h.b16 %v1133
  %v1485 = vunpack.c.l.b16 %v1134
  %v1486 = vunpack.c.h.b16 %v1134
  %v1487 = vunpack.c.l.b16 %v1135
  %v1488 = vunpack.c.h.b16 %v1135
  %v1489 = vunpack.c.l.b16 %v1136
  %v1490 = vunpack.c.h.b16 %v1136
  %v1491 = vunpack.c.l.b16 %v1137
  %v1492 = vunpack.c.h.b16 %v1137
  %v1493 = vunpack.c.l.b16 %v1138
  %v1494 = vunpack.c.h.b16 %v1138
  %v1495 = vunpack.c.l.b16 %v1139
  %v1496 = vunpack.c.h.b16 %v1139
  %v1497 = vunpack.c.l.b16 %v1140
  %v1498 = vunpack.c.h.b16 %v1140
  %v1499 = vunpack.c.l.b16 %v1141
  %v1500 = vunpack.c.h.b16 %v1141
  %v1501 = vunpack.c.l.b16 %v1142
  %v1502 = vunpack.c.h.b16 %v1142
  %v1503 = vunpack.c.l.b16 %v1143
  %v1504 = vunpack.c.h.b16 %v1143
  %v1505 = vunpack.c.l.b16 %v1144
  %v1506 = vunpack.c.h.b16 %v1144
  %v1507 = vunpack.c.l.b16 %v1145
  %v1508 = vunpack.c.h.b16 %v1145
  %v1509 = vunpack.c.l.b16 %v1146
  %v1510 = vunpack.c.h.b16 %v1146
  %v1511 = vunpack.c.l.b16 %v1147
  %v1512 = vunpack.c.h.b16 %v1147
  %v1513 = vunpack.c.l.b16 %v1148
  %v1514 = vunpack.c.h.b16 %v1148
  %v1515 = vunpack.c.l.b16 %v1149
  %v1516 = vunpack.c.h.b16 %v1149
  %v1517 = vunpack.c.l.b16 %v1150
  %v1518 = vunpack.c.h.b16 %v1150
  %v1519 = vunpack.c.l.b16 %v1151
  %v1520 = vunpack.c.h.b16 %v1151
  %v1521 = vunpack.c.l.b16 %v1152
  %v1522 = vunpack.c.h.b16 %v1152
  %v1523 = vunpack.c.l.b16 %v1153
  %v1524 = vunpack.c.h.b16 %v1153
  %v1525 = vunpack.c.l.b16 %v1154
  %v1526 = vunpack.c.h.b16 %v1154
  %v1527 = vunpack.c.l.b16 %v1155
  %v1528 = vunpack.c.h.b16 %v1155
  %v1529 = vunpack.c.l.b16 %v1156
  %v1530 = vunpack.c.h.b16 %v1156
  %v1531 = vunpack.c.l.b16 %v1157
  %v1532 = vunpack.c.h.b16 %v1157
  %v1533 = vunpack.c.l.b16 %v1158
  %v1534 = vunpack.c.h.b16 %v1158
  %v1535 = vunpack.c.l.b16 %v1159
  %v1536 = vunpack.c.h.b16 %v1159
  %v1537 = vunpack.c.l.b16 %v1160
  %v1538 = vunpack.c.h.b16 %v1160
  %v1539 = vunpack.c.l.b16 %v1161
  %v1540 = vunpack.c.h.b16 %v1161
  %v1541 = vunpack.c.l.b16 %v1162
  %v1542 = vunpack.c.h.b16 %v1162
  %v1543 = vunpack.c.l.b16 %v1163
  %v1544 = vunpack.c.h.b16 %v1163
  %v1545 = vunpack.c.l.b16 %v1164
  %v1546 = vunpack.c.h.b16 %v1164
  %v1547 = vunpack.c.l.b16 %v1165
  %v1548 = vunpack.c.h.b16 %v1165
  %v1549 = vunpack.c.l.b16 %v1166
  %v1550 = vunpack.c.h.b16 %v1166
  %v1551 = vpack.c.b16 %v1299, %v1295
  %v1552 = vpack.c.b16 %v1300, %v1296
  %v1553 = vpack.c.b16 %v1301, %v1297
  %v1554 = vpack.c.b16 %v1302, %v1298
  %v1555 = vpack.c.b16 %v1307, %v1303
  %v1556 = vpack.c.b16 %v1308, %v1304
  %v1557 = vpack.c.b16 %v1309, %v1305
  %v1558 = vpack.c.b16 %v1310, %v1306
  %v1559 = vpack.c.b16 %v1315, %v1311
  %v1560 = vpack.c.b16 %v1316, %v1312
  %v1561 = vpack.c.b16 %v1317, %v1313
  %v1562 = vpack.c.b16 %v1318, %v1314
  %v1563 = vpack.c.b16 %v1323, %v1319
  %v1564 = vpack.c.b16 %v1324, %v1320
  %v1565 = vpack.c.b16 %v1325, %v1321
  %v1566 = vpack.c.b16 %v1326, %v1322
  %v1567 = vpack.c.b16 %v1331, %v1327
  %v1568 = vpack.c.b16 %v1332, %v1328
  %v1569 = vpack.c.b16 %v1333, %v1329
  %v1570 = vpack.c.b16 %v1334, %v1330
  %v1571 = vpack.c.b16 %v1339, %v1335
  %v1572 = vpack.c.b16 %v1340, %v1336
  %v1573 = vpack.c.b16 %v1341, %v1337
  %v1574 = vpack.c.b16 %v1342, %v1338
  %v1575 = vpack.c.b16 %v1347, %v1343
  %v1576 = vpack.c.b16 %v1348, %v1344
  %v1577 = vpack.c.b16 %v1349, %v1345
  %v1578 = vpack.c.b16 %v1350, %v1346
  %v1579 = vpack.c.b16 %v1355, %v1351
  %v1580 = vpack.c.b16 %v1356, %v1352
  %v1581 = vpack.c.b16 %v1357, %v1353
  %v1582 = vpack.c.b16 %v1358, %v1354
  %v1583 = vpack.c.b16 %v1363, %v1359
  %v1584 = vpack.c.b16 %v1364, %v1360
  %v1585 = vpack.c.b16 %v1365, %v1361
  %v1586 = vpack.c.b16 %v1366, %v1362
  %v1587 = vpack.c.b16 %v1371, %v1367
  %v1588 = vpack.c.b16 %v1372, %v1368
  %v1589 = vpack.c.b16 %v1373, %v1369
  %v1590 = vpack.c.b16 %v1374, %v1370
  %v1591 = vpack.c.b16 %v1379, %v1375
  %v1592 = vpack.c.b16 %v1380, %v1376
  %v1593 = vpack.c.b16 %v1381, %v1377
  %v1594 = vpack.c.b16 %v1382, %v1378
  %v1595 = vpack.c.b16 %v1387, %v1383
  %v1596 = vpack.c.b16 %v1388, %v1384
  %v1597 = vpack.c.b16 %v1389, %v1385
  %v1598 = vpack.c.b16 %v1390, %v1386
  %v1599 = vpack.c.b16 %v1395, %v1391
  %v1600 = vpack.c.b16 %v1396, %v1392
  %v1601 = vpack.c.b16 %v1397, %v1393
  %v1602 = vpack.c.b16 %v1398, %v1394
  %v1603 = vpack.c.b16 %v1403, %v1399
  %v1604 = vpack.c.b16 %v1404, %v1400
  %v1605 = vpack.c.b16 %v1405, %v1401
  %v1606 = vpack.c.b16 %v1406, %v1402
  %v1607 = vpack.c.b16 %v1411, %v1407
  %v1608 = vpack.c.b16 %v1412, %v1408
  %v1609 = vpack.c.b16 %v1413, %v1409
  %v1610 = vpack.c.b16 %v1414, %v1410
  %v1611 = vpack.c.b16 %v1419, %v1415
  %v1612 = vpack.c.b16 %v1420, %v1416
  %v1613 = vpack.c.b16 %v1421, %v1417
  %v1614 = vpack.c.b16 %v1422, %v1418
  %v1615 = vpack.c.b16 %v1427, %v1423
  %v1616 = vpack.c.b16 %v1428, %v1424
  %v1617 = vpack.c.b16 %v1429, %v1425
  %v1618 = vpack.c.b16 %v1430, %v1426
  %v1619 = vpack.c.b16 %v1435, %v1431
  %v1620 = vpack.c.b16 %v1436, %v1432
  %v1621 = vpack.c.b16 %v1437, %v1433
  %v1622 = vpack.c.b16 %v1438, %v1434
  %v1623 = vpack.c.b16 %v1443, %v1439
  %v1624 = vpack.c.b16 %v1444, %v1440
  %v1625 = vpack.c.b16 %v1445, %v1441
  %v1626 = vpack.c.b16 %v1446, %v1442
  %v1627 = vpack.c.b16 %v1451, %v1447
  %v1628 = vpack.c.b16 %v1452, %v1448
  %v1629 = vpack.c.b16 %v1453, %v1449
  %v1630 = vpack.c.b16 %v1454, %v1450
  %v1631 = vpack.c.b16 %v1459, %v1455
  %v1632 = vpack.c.b16 %v1460, %v1456
  %v1633 = vpack.c.b16 %v1461, %v1457
  %v1634 = vpack.c.b16 %v1462, %v1458
  %v1635 = vpack.c.b16 %v1467, %v1463
  %v1636 = vpack.c.b16 %v1468, %v1464
  %v1637 = vpack.c.b16 %v1469, %v1465
  %v1638 = vpack.c.b16 %v1470, %v1466
  %v1639 = vpack.c.b16 %v1475, %v1471
  %v1640 = vpack.c.b16 %v1476, %v1472
  %v1641 = vpack.c.b16 %v1477, %v1473
  %v1642 = vpack.c.b16 %v1478, %v1474
  %v1643 = vpack.c.b16 %v1483, %v1479
  %v1644 = vpack.c.b16 %v1484, %v1480
  %v1645 = vpack.c.b16 %v1485, %v1481
  %v1646 = vpack.c.b16 %v1486, %v1482
  %v1647 = vpack.c.b16 %v1491, %v1487
  %v1648 = vpack.c.b16 %v1492, %v1488
  %v1649 = vpack.c.b16 %v1493, %v1489
  %v1650 = vpack.c.b16 %v1494, %v1490
  %v1651 = vpack.c.b16 %v1499, %v1495
  %v1652 = vpack.c.b16 %v1500, %v1496
  %v1653 = vpack.c.b16 %v1501, %v1497
  %v1654 = vpack.c.b16 %v1502, %v1498
  %v1655 = vpack.c.b16 %v1507, %v1503
  %v1656 = vpack.c.b16 %v1508, %v1504
  %v1657 = vpack.c.b16 %v1509, %v1505
  %v1658 = vpack.c.b16 %v1510, %v1506
  %v1659 = vpack.c.b16 %v1515, %v1511
  %v1660 = vpack.c.b16 %v1516, %v1512
  %v1661 = vpack.c.b16 %v1517, %v1513
  %v1662 = vpack.c.b16 %v1518, %v1514
  %v1663 = vpack.c.b16 %v1523, %v1519
  %v1664 = vpack.c.b16 %v1524, %v1520
  %v1665 = vpack.c.b16 %v1525, %v1521
  %v1666 = vpack.c.b16 %v1526, %v1522
  %v1667 = vpack.c.b16 %v1531, %v1527
  %v1668 = vpack.c.b16 %v1532, %v1528
  %v1669 = vpack.c.b16 %v1533, %v1529
  %v1670 = vpack.c.b16 %v1534, %v1530
  %v1671 = vpack.c.b16 %v1539, %v1535
  %v1672 = vpack.c.b16 %v1540, %v1536
  %v1673 = vpack.c.b16 %v1541, %v1537
  %v1674 = vpack.c.b16 %v1542, %v1538
  %v1675 = vpack.c.b16 %v1547, %v1543
  %v1676 = vpack.c.b16 %v1548, %v1544
  %v1677 = vpack.c.b16 %v1549, %v1545
  %v1678 = vpack.c.b16 %v1550, %v1546
  %1807 = vmatprep.subr.bf16.mxu0 %v1552
  %1808 = vmatpush1.bf16.msra.mxu0 %v1551
  %1809 = vmatprep.subr.bf16.mxu0 %v1556
  %1810 = vmatpush1.bf16.msra.mxu0 %v1555
  %1811 = vmatprep.subr.bf16.mxu0 %v1560
  %1812 = vmatpush1.bf16.msra.mxu0 %v1559
  %1813 = vmatprep.subr.bf16.mxu0 %v1564
  %1814 = vmatpush1.bf16.msra.mxu0 %v1563
  %1815 = vmatprep.subr.bf16.mxu0 %v1568
  %1816 = vmatpush1.bf16.msra.mxu0 %v1567
  %1817 = vmatprep.subr.bf16.mxu0 %v1572
  %1818 = vmatpush1.bf16.msra.mxu0 %v1571
  %1819 = vmatprep.subr.bf16.mxu0 %v1576
  %1820 = vmatpush1.bf16.msra.mxu0 %v1575
  %1821 = vmatprep.subr.bf16.mxu0 %v1580
  %1822 = vmatpush1.bf16.msra.mxu0 %v1579
  %1823 = vmatprep.subr.bf16.mxu0 %v1584
  %1824 = vmatpush1.bf16.msra.mxu0 %v1583
  %1825 = vmatprep.subr.bf16.mxu0 %v1588
  %1826 = vmatpush1.bf16.msra.mxu0 %v1587
  %1827 = vmatprep.subr.bf16.mxu0 %v1592
  %1828 = vmatpush1.bf16.msra.mxu0 %v1591
  %1829 = vmatprep.subr.bf16.mxu0 %v1596
  %1830 = vmatpush1.bf16.msra.mxu0 %v1595
  %1831 = vmatprep.subr.bf16.mxu0 %v1600
  %1832 = vmatpush1.bf16.msra.mxu0 %v1599
  %1833 = vmatprep.subr.bf16.mxu0 %v1604
  %1834 = vmatpush1.bf16.msra.mxu0 %v1603
  %1835 = vmatprep.subr.bf16.mxu0 %v1608
  %1836 = vmatpush1.bf16.msra.mxu0 %v1607
  %1837 = vmatprep.subr.bf16.mxu0 %v1612
  %1838 = vmatpush1.bf16.msra.mxu0 %v1611
  %1839 = vmatprep.mubr.bf16.mxu0 %v172
  %1840 = vmatmul.mubr.bf16.gmra.mrb[0].mxu0 %v171
  %v1841 = vpop.f32.mrb[0].mxu0
  %v1842 = vadd.f32 0.0, %v1841
  %v1843 = vpop.f32.mrb[0].mxu0
  %v1844 = vadd.f32 0.0, %v1843
  %v1845 = vpop.f32.mrb[0].mxu0
  %v1846 = vadd.f32 0.0, %v1845
  %v1847 = vpop.f32.mrb[0].mxu0
  %v1848 = vadd.f32 0.0, %v1847
  %1849 = vmatprep.mubr.bf16.mxu0 %v176
  %1850 = vmatmul.mubr.bf16.gmra.mrb[0].mxu0 %v175
  %v1851 = vpop.f32.mrb[0].mxu0
  %v1852 = vadd.f32 0.0, %v1851
  %v1853 = vpop.f32.mrb[0].mxu0
  %v1854 = vadd.f32 0.0, %v1853
  %v1855 = vpop.f32.mrb[0].mxu0
  %v1856 = vadd.f32 0.0, %v1855
  %v1857 = vpop.f32.mrb[0].mxu0
  %v1858 = vadd.f32 0.0, %v1857
  %1859 = vdwg.mxu0
  %1860 = vmatprep.subr.bf16.mxu0 %v1616
  %1861 = vmatpush1.bf16.msra.mxu0 %v1615
  %1862 = vmatprep.subr.bf16.mxu0 %v1620
  %1863 = vmatpush1.bf16.msra.mxu0 %v1619
  %1864 = vmatprep.subr.bf16.mxu0 %v1624
  %1865 = vmatpush1.bf16.msra.mxu0 %v1623
  %1866 = vmatprep.subr.bf16.mxu0 %v1628
  %1867 = vmatpush1.bf16.msra.mxu0 %v1627
  %1868 = vmatprep.subr.bf16.mxu0 %v1632
  %1869 = vmatpush1.bf16.msra.mxu0 %v1631
  %1870 = vmatprep.subr.bf16.mxu0 %v1636
  %1871 = vmatpush1.bf16.msra.mxu0 %v1635
  %1872 = vmatprep.subr.bf16.mxu0 %v1640
  %1873 = vmatpush1.bf16.msra.mxu0 %v1639
  %1874 = vmatprep.subr.bf16.mxu0 %v1644
  %1875 = vmatpush1.bf16.msra.mxu0 %v1643
  %1876 = vmatprep.subr.bf16.mxu0 %v1648
  %1877 = vmatpush1.bf16.msra.mxu0 %v1647
  %1878 = vmatprep.subr.bf16.mxu0 %v1652
  %1879 = vmatpush1.bf16.msra.mxu0 %v1651
  %1880 = vmatprep.subr.bf16.mxu0 %v1656
  %1881 = vmatpush1.bf16.msra.mxu0 %v1655
  %1882 = vmatprep.subr.bf16.mxu0 %v1660
  %1883 = vmatpush1.bf16.msra.mxu0 %v1659
  %1884 = vmatprep.subr.bf16.mxu0 %v1664
  %1885 = vmatpush1.bf16.msra.mxu0 %v1663
  %1886 = vmatprep.subr.bf16.mxu0 %v1668
  %1887 = vmatpush1.bf16.msra.mxu0 %v1667
  %1888 = vmatprep.subr.bf16.mxu0 %v1672
  %1889 = vmatpush1.bf16.msra.mxu0 %v1671
  %1890 = vmatprep.subr.bf16.mxu0 %v1676
  %1891 = vmatpush1.bf16.msra.mxu0 %v1675
  %1892 = vmatprep.mubr.bf16.mxu0 %v174
  %1893 = vmatmul.mubr.bf16.gmra.mrb[0].mxu0 %v173
  %v1894 = vpop.f32.mrb[0].mxu0
  %v1895 = vadd.f32 %v1842, %v1894
  %v1896 = vpop.f32.mrb[0].mxu0
  %v1897 = vadd.f32 %v1844, %v1896
  %v1898 = vpop.f32.mrb[0].mxu0
  %v1899 = vadd.f32 %v1846, %v1898
  %v1900 = vpop.f32.mrb[0].mxu0
  %v1901 = vadd.f32 %v1848, %v1900
  %1902 = vmatprep.mubr.bf16.mxu0 %v178
  %1903 = vmatmul.mubr.bf16.gmra.mrb[0].mxu0 %v177
  %v1904 = vpop.f32.mrb[0].mxu0
  %v1905 = vadd.f32 %v1852, %v1904
  %v1906 = vpop.f32.mrb[0].mxu0
  %v1907 = vadd.f32 %v1854, %v1906
  %v1908 = vpop.f32.mrb[0].mxu0
  %v1909 = vadd.f32 %v1856, %v1908
  %v1910 = vpop.f32.mrb[0].mxu0
  %v1911 = vadd.f32 %v1858, %v1910
  %1912 = vdwg.mxu0
  %1913 = vmatprep.subr.bf16.mxu0 %v1554
  %1914 = vmatpush1.bf16.msra.mxu0 %v1553
  %1915 = vmatprep.subr.bf16.mxu0 %v1558
  %1916 = vmatpush1.bf16.msra.mxu0 %v1557
  %1917 = vmatprep.subr.bf16.mxu0 %v1562
  %1918 = vmatpush1.bf16.msra.mxu0 %v1561
  %1919 = vmatprep.subr.bf16.mxu0 %v1566
  %1920 = vmatpush1.bf16.msra.mxu0 %v1565
  %1921 = vmatprep.subr.bf16.mxu0 %v1570
  %1922 = vmatpush1.bf16.msra.mxu0 %v1569
  %1923 = vmatprep.subr.bf16.mxu0 %v1574
  %1924 = vmatpush1.bf16.msra.mxu0 %v1573
  %1925 = vmatprep.subr.bf16.mxu0 %v1578
  %1926 = vmatpush1.bf16.msra.mxu0 %v1577
  %1927 = vmatprep.subr.bf16.mxu0 %v1582
  %1928 = vmatpush1.bf16.msra.mxu0 %v1581
  %1929 = vmatprep.subr.bf16.mxu0 %v1586
  %1930 = vmatpush1.bf16.msra.mxu0 %v1585
  %1931 = vmatprep.subr.bf16.mxu0 %v1590
  %1932 = vmatpush1.bf16.msra.mxu0 %v1589
  %1933 = vmatprep.subr.bf16.mxu0 %v1594
  %1934 = vmatpush1.bf16.msra.mxu0 %v1593
  %1935 = vmatprep.subr.bf16.mxu0 %v1598
  %1936 = vmatpush1.bf16.msra.mxu0 %v1597
  %1937 = vmatprep.subr.bf16.mxu0 %v1602
  %1938 = vmatpush1.bf16.msra.mxu0 %v1601
  %1939 = vmatprep.subr.bf16.mxu0 %v1606
  %1940 = vmatpush1.bf16.msra.mxu0 %v1605
  %1941 = vmatprep.subr.bf16.mxu0 %v1610
  %1942 = vmatpush1.bf16.msra.mxu0 %v1609
  %1943 = vmatprep.subr.bf16.mxu0 %v1614
  %1944 = vmatpush1.bf16.msra.mxu0 %v1613
  %1945 = vmatprep.mubr.bf16.mxu0 %v172
  %1946 = vmatmul.mubr.bf16.gmra.mrb[0].mxu0 %v171
  %v1947 = vpop.f32.mrb[0].mxu0
  %v1948 = vadd.f32 0.0, %v1947
  %v1949 = vpop.f32.mrb[0].mxu0
  %v1950 = vadd.f32 0.0, %v1949
  %v1951 = vpop.f32.mrb[0].mxu0
  %v1952 = vadd.f32 0.0, %v1951
  %v1953 = vpop.f32.mrb[0].mxu0
  %v1954 = vadd.f32 0.0, %v1953
  %1955 = vmatprep.mubr.bf16.mxu0 %v176
  %1956 = vmatmul.mubr.bf16.gmra.mrb[0].mxu0 %v175
  %v1957 = vpop.f32.mrb[0].mxu0
  %v1958 = vadd.f32 0.0, %v1957
  %v1959 = vpop.f32.mrb[0].mxu0
  %v1960 = vadd.f32 0.0, %v1959
  %v1961 = vpop.f32.mrb[0].mxu0
  %v1962 = vadd.f32 0.0, %v1961
  %v1963 = vpop.f32.mrb[0].mxu0
  %v1964 = vadd.f32 0.0, %v1963
  %1965 = vdwg.mxu0
  %1966 = vmatprep.subr.bf16.mxu0 %v1618
  %1967 = vmatpush1.bf16.msra.mxu0 %v1617
  %1968 = vmatprep.subr.bf16.mxu0 %v1622
  %1969 = vmatpush1.bf16.msra.mxu0 %v1621
  %1970 = vmatprep.subr.bf16.mxu0 %v1626
  %1971 = vmatpush1.bf16.msra.mxu0 %v1625
  %1972 = vmatprep.subr.bf16.mxu0 %v1630
  %1973 = vmatpush1.bf16.msra.mxu0 %v1629
  %1974 = vmatprep.subr.bf16.mxu0 %v1634
  %1975 = vmatpush1.bf16.msra.mxu0 %v1633
  %1976 = vmatprep.subr.bf16.mxu0 %v1638
  %1977 = vmatpush1.bf16.msra.mxu0 %v1637
  %1978 = vmatprep.subr.bf16.mxu0 %v1642
  %1979 = vmatpush1.bf16.msra.mxu0 %v1641
  %1980 = vmatprep.subr.bf16.mxu0 %v1646
  %1981 = vmatpush1.bf16.msra.mxu0 %v1645
  %1982 = vmatprep.subr.bf16.mxu0 %v1650
  %1983 = vmatpush1.bf16.msra.mxu0 %v1649
  %1984 = vmatprep.subr.bf16.mxu0 %v1654
  %1985 = vmatpush1.bf16.msra.mxu0 %v1653
  %1986 = vmatprep.subr.bf16.mxu0 %v1658
  %1987 = vmatpush1.bf16.msra.mxu0 %v1657
  %1988 = vmatprep.subr.bf16.mxu0 %v1662
  %1989 = vmatpush1.bf16.msra.mxu0 %v1661
  %1990 = vmatprep.subr.bf16.mxu0 %v1666
  %1991 = vmatpush1.bf16.msra.mxu0 %v1665
  %1992 = vmatprep.subr.bf16.mxu0 %v1670
  %1993 = vmatpush1.bf16.msra.mxu0 %v1669
  %1994 = vmatprep.subr.bf16.mxu0 %v1674
  %1995 = vmatpush1.bf16.msra.mxu0 %v1673
  %1996 = vmatprep.subr.bf16.mxu0 %v1678
  %1997 = vmatpush1.bf16.msra.mxu0 %v1677
  %1998 = vmatprep.mubr.bf16.mxu0 %v174
  %1999 = vmatmul.mubr.bf16.gmra.mrb[0].mxu0 %v173
  %v2000 = vpop.f32.mrb[0].mxu0
  %v2001 = vadd.f32 %v1948, %v2000
  %v2002 = vpop.f32.mrb[0].mxu0
  %v2003 = vadd.f32 %v1950, %v2002
  %v2004 = vpop.f32.mrb[0].mxu0
  %v2005 = vadd.f32 %v1952, %v2004
  %v2006 = vpop.f32.mrb[0].mxu0
  %v2007 = vadd.f32 %v1954, %v2006
  %2008 = vmatprep.mubr.bf16.mxu0 %v178
  %2009 = vmatmul.mubr.bf16.gmra.mrb[0].mxu0 %v177
  %v2010 = vpop.f32.mrb[0].mxu0
  %v2011 = vadd.f32 %v1958, %v2010
  %v2012 = vpop.f32.mrb[0].mxu0
  %v2013 = vadd.f32 %v1960, %v2012
  %v2014 = vpop.f32.mrb[0].mxu0
  %v2015 = vadd.f32 %v1962, %v2014
  %v2016 = vpop.f32.mrb[0].mxu0
  %v2017 = vadd.f32 %v1964, %v2016
  %2018 = vdwg.mxu0
  %v2019 = vld [vmem:[%s1 + $0x800] sm:$0xff]
  %v2020 = vld [vmem:[%s1 + $0x808] sm:$0xff]
  %v2021 = vld [vmem:[%s1 + $0x810] sm:$0xff]
  %v2022 = vld [vmem:[%s1 + $0x818] sm:$0xff]
  %v2023 = vld [vmem:[%s1 + $0x820] sm:$0xff]
  %v2024 = vld [vmem:[%s1 + $0x828] sm:$0xff]
  %v2025 = vld [vmem:[%s1 + $0x830] sm:$0xff]
  %v2026 = vld [vmem:[%s1 + $0x838] sm:$0xff]
  %v2027 = vld [vmem:[%s1 + $0x840] sm:$0xff]
  %v2028 = vld [vmem:[%s1 + $0x848] sm:$0xff]
  %v2029 = vld [vmem:[%s1 + $0x850] sm:$0xff]
  %v2030 = vld [vmem:[%s1 + $0x858] sm:$0xff]
  %v2031 = vld [vmem:[%s1 + $0x860] sm:$0xff]
  %v2032 = vld [vmem:[%s1 + $0x868] sm:$0xff]
  %v2033 = vld [vmem:[%s1 + $0x870] sm:$0xff]
  %v2034 = vld [vmem:[%s1 + $0x878] sm:$0xff]
  %v2035 = vld [vmem:[%s1 + $0x880] sm:$0xff]
  %v2036 = vld [vmem:[%s1 + $0x888] sm:$0xff]
  %v2037 = vld [vmem:[%s1 + $0x890] sm:$0xff]
  %v2038 = vld [vmem:[%s1 + $0x898] sm:$0xff]
  %v2039 = vld [vmem:[%s1 + $0x8a0] sm:$0xff]
  %v2040 = vld [vmem:[%s1 + $0x8a8] sm:$0xff]
  %v2041 = vld [vmem:[%s1 + $0x8b0] sm:$0xff]
  %v2042 = vld [vmem:[%s1 + $0x8b8] sm:$0xff]
  %v2043 = vld [vmem:[%s1 + $0x8c0] sm:$0xff]
  %v2044 = vld [vmem:[%s1 + $0x8c8] sm:$0xff]
  %v2045 = vld [vmem:[%s1 + $0x8d0] sm:$0xff]
  %v2046 = vld [vmem:[%s1 + $0x8d8] sm:$0xff]
  %v2047 = vld [vmem:[%s1 + $0x8e0] sm:$0xff]
  %v2048 = vld [vmem:[%s1 + $0x8e8] sm:$0xff]
  %v2049 = vld [vmem:[%s1 + $0x8f0] sm:$0xff]
  %v2050 = vld [vmem:[%s1 + $0x8f8] sm:$0xff]
  %v2051 = vld [vmem:[%s1 + $0x900] sm:$0xff]
  %v2052 = vld [vmem:[%s1 + $0x908] sm:$0xff]
  %v2053 = vld [vmem:[%s1 + $0x910] sm:$0xff]
  %v2054 = vld [vmem:[%s1 + $0x918] sm:$0xff]
  %v2055 = vld [vmem:[%s1 + $0x920] sm:$0xff]
  %v2056 = vld [vmem:[%s1 + $0x928] sm:$0xff]
  %v2057 = vld [vmem:[%s1 + $0x930] sm:$0xff]
  %v2058 = vld [vmem:[%s1 + $0x938] sm:$0xff]
  %v2059 = vld [vmem:[%s1 + $0x940] sm:$0xff]
  %v2060 = vld [vmem:[%s1 + $0x948] sm:$0xff]
  %v2061 = vld [vmem:[%s1 + $0x950] sm:$0xff]
  %v2062 = vld [vmem:[%s1 + $0x958] sm:$0xff]
  %v2063 = vld [vmem:[%s1 + $0x960] sm:$0xff]
  %v2064 = vld [vmem:[%s1 + $0x968] sm:$0xff]
  %v2065 = vld [vmem:[%s1 + $0x970] sm:$0xff]
  %v2066 = vld [vmem:[%s1 + $0x978] sm:$0xff]
  %v2067 = vld [vmem:[%s1 + $0x980] sm:$0xff]
  %v2068 = vld [vmem:[%s1 + $0x988] sm:$0xff]
  %v2069 = vld [vmem:[%s1 + $0x990] sm:$0xff]
  %v2070 = vld [vmem:[%s1 + $0x998] sm:$0xff]
  %v2071 = vld [vmem:[%s1 + $0x9a0] sm:$0xff]
  %v2072 = vld [vmem:[%s1 + $0x9a8] sm:$0xff]
  %v2073 = vld [vmem:[%s1 + $0x9b0] sm:$0xff]
  %v2074 = vld [vmem:[%s1 + $0x9b8] sm:$0xff]
  %v2075 = vld [vmem:[%s1 + $0x9c0] sm:$0xff]
  %v2076 = vld [vmem:[%s1 + $0x9c8] sm:$0xff]
  %v2077 = vld [vmem:[%s1 + $0x9d0] sm:$0xff]
  %v2078 = vld [vmem:[%s1 + $0x9d8] sm:$0xff]
  %v2079 = vld [vmem:[%s1 + $0x9e0] sm:$0xff]
  %v2080 = vld [vmem:[%s1 + $0x9e8] sm:$0xff]
  %v2081 = vld [vmem:[%s1 + $0x9f0] sm:$0xff]
  %v2082 = vld [vmem:[%s1 + $0x9f8] sm:$0xff]
  %v2083 = vld [vmem:[%s1 + $0xa00] sm:$0xff]
  %v2084 = vld [vmem:[%s1 + $0xa08] sm:$0xff]
  %v2085 = vld [vmem:[%s1 + $0xa10] sm:$0xff]
  %v2086 = vld [vmem:[%s1 + $0xa18] sm:$0xff]
  %v2087 = vld [vmem:[%s1 + $0xa20] sm:$0xff]
  %v2088 = vld [vmem:[%s1 + $0xa28] sm:$0xff]
  %v2089 = vld [vmem:[%s1 + $0xa30] sm:$0xff]
  %v2090 = vld [vmem:[%s1 + $0xa38] sm:$0xff]
  %v2091 = vld [vmem:[%s1 + $0xa40] sm:$0xff]
  %v2092 = vld [vmem:[%s1 + $0xa48] sm:$0xff]
  %v2093 = vld [vmem:[%s1 + $0xa50] sm:$0xff]
  %v2094 = vld [vmem:[%s1 + $0xa58] sm:$0xff]
  %v2095 = vld [vmem:[%s1 + $0xa60] sm:$0xff]
  %v2096 = vld [vmem:[%s1 + $0xa68] sm:$0xff]
  %v2097 = vld [vmem:[%s1 + $0xa70] sm:$0xff]
  %v2098 = vld [vmem:[%s1 + $0xa78] sm:$0xff]
  %v2099 = vld [vmem:[%s1 + $0xa80] sm:$0xff]
  %v2100 = vld [vmem:[%s1 + $0xa88] sm:$0xff]
  %v2101 = vld [vmem:[%s1 + $0xa90] sm:$0xff]
  %v2102 = vld [vmem:[%s1 + $0xa98] sm:$0xff]
  %v2103 = vld [vmem:[%s1 + $0xaa0] sm:$0xff]
  %v2104 = vld [vmem:[%s1 + $0xaa8] sm:$0xff]
  %v2105 = vld [vmem:[%s1 + $0xab0] sm:$0xff]
  %v2106 = vld [vmem:[%s1 + $0xab8] sm:$0xff]
  %v2107 = vld [vmem:[%s1 + $0xac0] sm:$0xff]
  %v2108 = vld [vmem:[%s1 + $0xac8] sm:$0xff]
  %v2109 = vld [vmem:[%s1 + $0xad0] sm:$0xff]
  %v2110 = vld [vmem:[%s1 + $0xad8] sm:$0xff]
  %v2111 = vld [vmem:[%s1 + $0xae0] sm:$0xff]
  %v2112 = vld [vmem:[%s1 + $0xae8] sm:$0xff]
  %v2113 = vld [vmem:[%s1 + $0xaf0] sm:$0xff]
  %v2114 = vld [vmem:[%s1 + $0xaf8] sm:$0xff]
  %v2115 = vld [vmem:[%s1 + $0xb00] sm:$0xff]
  %v2116 = vld [vmem:[%s1 + $0xb08] sm:$0xff]
  %v2117 = vld [vmem:[%s1 + $0xb10] sm:$0xff]
  %v2118 = vld [vmem:[%s1 + $0xb18] sm:$0xff]
  %v2119 = vld [vmem:[%s1 + $0xb20] sm:$0xff]
  %v2120 = vld [vmem:[%s1 + $0xb28] sm:$0xff]
  %v2121 = vld [vmem:[%s1 + $0xb30] sm:$0xff]
  %v2122 = vld [vmem:[%s1 + $0xb38] sm:$0xff]
  %v2123 = vld [vmem:[%s1 + $0xb40] sm:$0xff]
  %v2124 = vld [vmem:[%s1 + $0xb48] sm:$0xff]
  %v2125 = vld [vmem:[%s1 + $0xb50] sm:$0xff]
  %v2126 = vld [vmem:[%s1 + $0xb58] sm:$0xff]
  %v2127 = vld [vmem:[%s1 + $0xb60] sm:$0xff]
  %v2128 = vld [vmem:[%s1 + $0xb68] sm:$0xff]
  %v2129 = vld [vmem:[%s1 + $0xb70] sm:$0xff]
  %v2130 = vld [vmem:[%s1 + $0xb78] sm:$0xff]
  %v2131 = vld [vmem:[%s1 + $0xb80] sm:$0xff]
  %v2132 = vld [vmem:[%s1 + $0xb88] sm:$0xff]
  %v2133 = vld [vmem:[%s1 + $0xb90] sm:$0xff]
  %v2134 = vld [vmem:[%s1 + $0xb98] sm:$0xff]
  %v2135 = vld [vmem:[%s1 + $0xba0] sm:$0xff]
  %v2136 = vld [vmem:[%s1 + $0xba8] sm:$0xff]
  %v2137 = vld [vmem:[%s1 + $0xbb0] sm:$0xff]
  %v2138 = vld [vmem:[%s1 + $0xbb8] sm:$0xff]
  %v2139 = vld [vmem:[%s1 + $0xbc0] sm:$0xff]
  %v2140 = vld [vmem:[%s1 + $0xbc8] sm:$0xff]
  %v2141 = vld [vmem:[%s1 + $0xbd0] sm:$0xff]
  %v2142 = vld [vmem:[%s1 + $0xbd8] sm:$0xff]
  %v2143 = vld [vmem:[%s1 + $0xbe0] sm:$0xff]
  %v2144 = vld [vmem:[%s1 + $0xbe8] sm:$0xff]
  %v2145 = vld [vmem:[%s1 + $0xbf0] sm:$0xff]
  %v2146 = vld [vmem:[%s1 + $0xbf8] sm:$0xff]
  %v2275 = vunpack.c.l.b16 %v2019
  %v2276 = vunpack.c.h.b16 %v2019
  %v2277 = vunpack.c.l.b16 %v2020
  %v2278 = vunpack.c.h.b16 %v2020
  %v2279 = vunpack.c.l.b16 %v2021
  %v2280 = vunpack.c.h.b16 %v2021
  %v2281 = vunpack.c.l.b16 %v2022
  %v2282 = vunpack.c.h.b16 %v2022
  %v2283 = vunpack.c.l.b16 %v2023
  %v2284 = vunpack.c.h.b16 %v2023
  %v2285 = vunpack.c.l.b16 %v2024
  %v2286 = vunpack.c.h.b16 %v2024
  %v2287 = vunpack.c.l.b16 %v2025
  %v2288 = vunpack.c.h.b16 %v2025
  %v2289 = vunpack.c.l.b16 %v2026
  %v2290 = vunpack.c.h.b16 %v2026
  %v2291 = vunpack.c.l.b16 %v2027
  %v2292 = vunpack.c.h.b16 %v2027
  %v2293 = vunpack.c.l.b16 %v2028
  %v2294 = vunpack.c.h.b16 %v2028
  %v2295 = vunpack.c.l.b16 %v2029
  %v2296 = vunpack.c.h.b16 %v2029
  %v2297 = vunpack.c.l.b16 %v2030
  %v2298 = vunpack.c.h.b16 %v2030
  %v2299 = vunpack.c.l.b16 %v2031
  %v2300 = vunpack.c.h.b16 %v2031
  %v2301 = vunpack.c.l.b16 %v2032
  %v2302 = vunpack.c.h.b16 %v2032
  %v2303 = vunpack.c.l.b16 %v2033
  %v2304 = vunpack.c.h.b16 %v2033
  %v2305 = vunpack.c.l.b16 %v2034
  %v2306 = vunpack.c.h.b16 %v2034
  %v2307 = vunpack.c.l.b16 %v2035
  %v2308 = vunpack.c.h.b16 %v2035
  %v2309 = vunpack.c.l.b16 %v2036
  %v2310 = vunpack.c.h.b16 %v2036
  %v2311 = vunpack.c.l.b16 %v2037
  %v2312 = vunpack.c.h.b16 %v2037
  %v2313 = vunpack.c.l.b16 %v2038
  %v2314 = vunpack.c.h.b16 %v2038
  %v2315 = vunpack.c.l.b16 %v2039
  %v2316 = vunpack.c.h.b16 %v2039
  %v2317 = vunpack.c.l.b16 %v2040
  %v2318 = vunpack.c.h.b16 %v2040
  %v2319 = vunpack.c.l.b16 %v2041
  %v2320 = vunpack.c.h.b16 %v2041
  %v2321 = vunpack.c.l.b16 %v2042
  %v2322 = vunpack.c.h.b16 %v2042
  %v2323 = vunpack.c.l.b16 %v2043
  %v2324 = vunpack.c.h.b16 %v2043
  %v2325 = vunpack.c.l.b16 %v2044
  %v2326 = vunpack.c.h.b16 %v2044
  %v2327 = vunpack.c.l.b16 %v2045
  %v2328 = vunpack.c.h.b16 %v2045
  %v2329 = vunpack.c.l.b16 %v2046
  %v2330 = vunpack.c.h.b16 %v2046
  %v2331 = vunpack.c.l.b16 %v2047
  %v2332 = vunpack.c.h.b16 %v2047
  %v2333 = vunpack.c.l.b16 %v2048
  %v2334 = vunpack.c.h.b16 %v2048
  %v2335 = vunpack.c.l.b16 %v2049
  %v2336 = vunpack.c.h.b16 %v2049
  %v2337 = vunpack.c.l.b16 %v2050
  %v2338 = vunpack.c.h.b16 %v2050
  %v2339 = vunpack.c.l.b16 %v2051
  %v2340 = vunpack.c.h.b16 %v2051
  %v2341 = vunpack.c.l.b16 %v2052
  %v2342 = vunpack.c.h.b16 %v2052
  %v2343 = vunpack.c.l.b16 %v2053
  %v2344 = vunpack.c.h.b16 %v2053
  %v2345 = vunpack.c.l.b16 %v2054
  %v2346 = vunpack.c.h.b16 %v2054
  %v2347 = vunpack.c.l.b16 %v2055
  %v2348 = vunpack.c.h.b16 %v2055
  %v2349 = vunpack.c.l.b16 %v2056
  %v2350 = vunpack.c.h.b16 %v2056
  %v2351 = vunpack.c.l.b16 %v2057
  %v2352 = vunpack.c.h.b16 %v2057
  %v2353 = vunpack.c.l.b16 %v2058
  %v2354 = vunpack.c.h.b16 %v2058
  %v2355 = vunpack.c.l.b16 %v2059
  %v2356 = vunpack.c.h.b16 %v2059
  %v2357 = vunpack.c.l.b16 %v2060
  %v2358 = vunpack.c.h.b16 %v2060
  %v2359 = vunpack.c.l.b16 %v2061
  %v2360 = vunpack.c.h.b16 %v2061
  %v2361 = vunpack.c.l.b16 %v2062
  %v2362 = vunpack.c.h.b16 %v2062
  %v2363 = vunpack.c.l.b16 %v2063
  %v2364 = vunpack.c.h.b16 %v2063
  %v2365 = vunpack.c.l.b16 %v2064
  %v2366 = vunpack.c.h.b16 %v2064
  %v2367 = vunpack.c.l.b16 %v2065
  %v2368 = vunpack.c.h.b16 %v2065
  %v2369 = vunpack.c.l.b16 %v2066
  %v2370 = vunpack.c.h.b16 %v2066
  %v2371 = vunpack.c.l.b16 %v2067
  %v2372 = vunpack.c.h.b16 %v2067
  %v2373 = vunpack.c.l.b16 %v2068
  %v2374 = vunpack.c.h.b16 %v2068
  %v2375 = vunpack.c.l.b16 %v2069
  %v2376 = vunpack.c.h.b16 %v2069
  %v2377 = vunpack.c.l.b16 %v2070
  %v2378 = vunpack.c.h.b16 %v2070
  %v2379 = vunpack.c.l.b16 %v2071
  %v2380 = vunpack.c.h.b16 %v2071
  %v2381 = vunpack.c.l.b16 %v2072
  %v2382 = vunpack.c.h.b16 %v2072
  %v2383 = vunpack.c.l.b16 %v2073
  %v2384 = vunpack.c.h.b16 %v2073
  %v2385 = vunpack.c.l.b16 %v2074
  %v2386 = vunpack.c.h.b16 %v2074
  %v2387 = vunpack.c.l.b16 %v2075
  %v2388 = vunpack.c.h.b16 %v2075
  %v2389 = vunpack.c.l.b16 %v2076
  %v2390 = vunpack.c.h.b16 %v2076
  %v2391 = vunpack.c.l.b16 %v2077
  %v2392 = vunpack.c.h.b16 %v2077
  %v2393 = vunpack.c.l.b16 %v2078
  %v2394 = vunpack.c.h.b16 %v2078
  %v2395 = vunpack.c.l.b16 %v2079
  %v2396 = vunpack.c.h.b16 %v2079
  %v2397 = vunpack.c.l.b16 %v2080
  %v2398 = vunpack.c.h.b16 %v2080
  %v2399 = vunpack.c.l.b16 %v2081
  %v2400 = vunpack.c.h.b16 %v2081
  %v2401 = vunpack.c.l.b16 %v2082
  %v2402 = vunpack.c.h.b16 %v2082
  %v2403 = vunpack.c.l.b16 %v2083
  %v2404 = vunpack.c.h.b16 %v2083
  %v2405 = vunpack.c.l.b16 %v2084
  %v2406 = vunpack.c.h.b16 %v2084
  %v2407 = vunpack.c.l.b16 %v2085
  %v2408 = vunpack.c.h.b16 %v2085
  %v2409 = vunpack.c.l.b16 %v2086
  %v2410 = vunpack.c.h.b16 %v2086
  %v2411 = vunpack.c.l.b16 %v2087
  %v2412 = vunpack.c.h.b16 %v2087
  %v2413 = vunpack.c.l.b16 %v2088
  %v2414 = vunpack.c.h.b16 %v2088
  %v2415 = vunpack.c.l.b16 %v2089
  %v2416 = vunpack.c.h.b16 %v2089
  %v2417 = vunpack.c.l.b16 %v2090
  %v2418 = vunpack.c.h.b16 %v2090
  %v2419 = vunpack.c.l.b16 %v2091
  %v2420 = vunpack.c.h.b16 %v2091
  %v2421 = vunpack.c.l.b16 %v2092
  %v2422 = vunpack.c.h.b16 %v2092
  %v2423 = vunpack.c.l.b16 %v2093
  %v2424 = vunpack.c.h.b16 %v2093
  %v2425 = vunpack.c.l.b16 %v2094
  %v2426 = vunpack.c.h.b16 %v2094
  %v2427 = vunpack.c.l.b16 %v2095
  %v2428 = vunpack.c.h.b16 %v2095
  %v2429 = vunpack.c.l.b16 %v2096
  %v2430 = vunpack.c.h.b16 %v2096
  %v2431 = vunpack.c.l.b16 %v2097
  %v2432 = vunpack.c.h.b16 %v2097
  %v2433 = vunpack.c.l.b16 %v2098
  %v2434 = vunpack.c.h.b16 %v2098
  %v2435 = vunpack.c.l.b16 %v2099
  %v2436 = vunpack.c.h.b16 %v2099
  %v2437 = vunpack.c.l.b16 %v2100
  %v2438 = vunpack.c.h.b16 %v2100
  %v2439 = vunpack.c.l.b16 %v2101
  %v2440 = vunpack.c.h.b16 %v2101
  %v2441 = vunpack.c.l.b16 %v2102
  %v2442 = vunpack.c.h.b16 %v2102
  %v2443 = vunpack.c.l.b16 %v2103
  %v2444 = vunpack.c.h.b16 %v2103
  %v2445 = vunpack.c.l.b16 %v2104
  %v2446 = vunpack.c.h.b16 %v2104
  %v2447 = vunpack.c.l.b16 %v2105
  %v2448 = vunpack.c.h.b16 %v2105
  %v2449 = vunpack.c.l.b16 %v2106
  %v2450 = vunpack.c.h.b16 %v2106
  %v2451 = vunpack.c.l.b16 %v2107
  %v2452 = vunpack.c.h.b16 %v2107
  %v2453 = vunpack.c.l.b16 %v2108
  %v2454 = vunpack.c.h.b16 %v2108
  %v2455 = vunpack.c.l.b16 %v2109
  %v2456 = vunpack.c.h.b16 %v2109
  %v2457 = vunpack.c.l.b16 %v2110
  %v2458 = vunpack.c.h.b16 %v2110
  %v2459 = vunpack.c.l.b16 %v2111
  %v2460 = vunpack.c.h.b16 %v2111
  %v2461 = vunpack.c.l.b16 %v2112
  %v2462 = vunpack.c.h.b16 %v2112
  %v2463 = vunpack.c.l.b16 %v2113
  %v2464 = vunpack.c.h.b16 %v2113
  %v2465 = vunpack.c.l.b16 %v2114
  %v2466 = vunpack.c.h.b16 %v2114
  %v2467 = vunpack.c.l.b16 %v2115
  %v2468 = vunpack.c.h.b16 %v2115
  %v2469 = vunpack.c.l.b16 %v2116
  %v2470 = vunpack.c.h.b16 %v2116
  %v2471 = vunpack.c.l.b16 %v2117
  %v2472 = vunpack.c.h.b16 %v2117
  %v2473 = vunpack.c.l.b16 %v2118
  %v2474 = vunpack.c.h.b16 %v2118
  %v2475 = vunpack.c.l.b16 %v2119
  %v2476 = vunpack.c.h.b16 %v2119
  %v2477 = vunpack.c.l.b16 %v2120
  %v2478 = vunpack.c.h.b16 %v2120
  %v2479 = vunpack.c.l.b16 %v2121
  %v2480 = vunpack.c.h.b16 %v2121
  %v2481 = vunpack.c.l.b16 %v2122
  %v2482 = vunpack.c.h.b16 %v2122
  %v2483 = vunpack.c.l.b16 %v2123
  %v2484 = vunpack.c.h.b16 %v2123
  %v2485 = vunpack.c.l.b16 %v2124
  %v2486 = vunpack.c.h.b16 %v2124
  %v2487 = vunpack.c.l.b16 %v2125
  %v2488 = vunpack.c.h.b16 %v2125
  %v2489 = vunpack.c.l.b16 %v2126
  %v2490 = vunpack.c.h.b16 %v2126
  %v2491 = vunpack.c.l.b16 %v2127
  %v2492 = vunpack.c.h.b16 %v2127
  %v2493 = vunpack.c.l.b16 %v2128
  %v2494 = vunpack.c.h.b16 %v2128
  %v2495 = vunpack.c.l.b16 %v2129
  %v2496 = vunpack.c.h.b16 %v2129
  %v2497 = vunpack.c.l.b16 %v2130
  %v2498 = vunpack.c.h.b16 %v2130
  %v2499 = vunpack.c.l.b16 %v2131
  %v2500 = vunpack.c.h.b16 %v2131
  %v2501 = vunpack.c.l.b16 %v2132
  %v2502 = vunpack.c.h.b16 %v2132
  %v2503 = vunpack.c.l.b16 %v2133
  %v2504 = vunpack.c.h.b16 %v2133
  %v2505 = vunpack.c.l.b16 %v2134
  %v2506 = vunpack.c.h.b16 %v2134
  %v2507 = vunpack.c.l.b16 %v2135
  %v2508 = vunpack.c.h.b16 %v2135
  %v2509 = vunpack.c.l.b16 %v2136
  %v2510 = vunpack.c.h.b16 %v2136
  %v2511 = vunpack.c.l.b16 %v2137
  %v2512 = vunpack.c.h.b16 %v2137
  %v2513 = vunpack.c.l.b16 %v2138
  %v2514 = vunpack.c.h.b16 %v2138
  %v2515 = vunpack.c.l.b16 %v2139
  %v2516 = vunpack.c.h.b16 %v2139
  %v2517 = vunpack.c.l.b16 %v2140
  %v2518 = vunpack.c.h.b16 %v2140
  %v2519 = vunpack.c.l.b16 %v2141
  %v2520 = vunpack.c.h.b16 %v2141
  %v2521 = vunpack.c.l.b16 %v2142
  %v2522 = vunpack.c.h.b16 %v2142
  %v2523 = vunpack.c.l.b16 %v2143
  %v2524 = vunpack.c.h.b16 %v2143
  %v2525 = vunpack.c.l.b16 %v2144
  %v2526 = vunpack.c.h.b16 %v2144
  %v2527 = vunpack.c.l.b16 %v2145
  %v2528 = vunpack.c.h.b16 %v2145
  %v2529 = vunpack.c.l.b16 %v2146
  %v2530 = vunpack.c.h.b16 %v2146
  %v2531 = vpack.c.b16 %v2279, %v2275
  %v2532 = vpack.c.b16 %v2280, %v2276
  %v2533 = vpack.c.b16 %v2281, %v2277
  %v2534 = vpack.c.b16 %v2282, %v2278
  %v2535 = vpack.c.b16 %v2287, %v2283
  %v2536 = vpack.c.b16 %v2288, %v2284
  %v2537 = vpack.c.b16 %v2289, %v2285
  %v2538 = vpack.c.b16 %v2290, %v2286
  %v2539 = vpack.c.b16 %v2295, %v2291
  %v2540 = vpack.c.b16 %v2296, %v2292
  %v2541 = vpack.c.b16 %v2297, %v2293
  %v2542 = vpack.c.b16 %v2298, %v2294
  %v2543 = vpack.c.b16 %v2303, %v2299
  %v2544 = vpack.c.b16 %v2304, %v2300
  %v2545 = vpack.c.b16 %v2305, %v2301
  %v2546 = vpack.c.b16 %v2306, %v2302
  %v2547 = vpack.c.b16 %v2311, %v2307
  %v2548 = vpack.c.b16 %v2312, %v2308
  %v2549 = vpack.c.b16 %v2313, %v2309
  %v2550 = vpack.c.b16 %v2314, %v2310
  %v2551 = vpack.c.b16 %v2319, %v2315
  %v2552 = vpack.c.b16 %v2320, %v2316
  %v2553 = vpack.c.b16 %v2321, %v2317
  %v2554 = vpack.c.b16 %v2322, %v2318
  %v2555 = vpack.c.b16 %v2327, %v2323
  %v2556 = vpack.c.b16 %v2328, %v2324
  %v2557 = vpack.c.b16 %v2329, %v2325
  %v2558 = vpack.c.b16 %v2330, %v2326
  %v2559 = vpack.c.b16 %v2335, %v2331
  %v2560 = vpack.c.b16 %v2336, %v2332
  %v2561 = vpack.c.b16 %v2337, %v2333
  %v2562 = vpack.c.b16 %v2338, %v2334
  %v2563 = vpack.c.b16 %v2343, %v2339
  %v2564 = vpack.c.b16 %v2344, %v2340
  %v2565 = vpack.c.b16 %v2345, %v2341
  %v2566 = vpack.c.b16 %v2346, %v2342
  %v2567 = vpack.c.b16 %v2351, %v2347
  %v2568 = vpack.c.b16 %v2352, %v2348
  %v2569 = vpack.c.b16 %v2353, %v2349
  %v2570 = vpack.c.b16 %v2354, %v2350
  %v2571 = vpack.c.b16 %v2359, %v2355
  %v2572 = vpack.c.b16 %v2360, %v2356
  %v2573 = vpack.c.b16 %v2361, %v2357
  %v2574 = vpack.c.b16 %v2362, %v2358
  %v2575 = vpack.c.b16 %v2367, %v2363
  %v2576 = vpack.c.b16 %v2368, %v2364
  %v2577 = vpack.c.b16 %v2369, %v2365
  %v2578 = vpack.c.b16 %v2370, %v2366
  %v2579 = vpack.c.b16 %v2375, %v2371
  %v2580 = vpack.c.b16 %v2376, %v2372
  %v2581 = vpack.c.b16 %v2377, %v2373
  %v2582 = vpack.c.b16 %v2378, %v2374
  %v2583 = vpack.c.b16 %v2383, %v2379
  %v2584 = vpack.c.b16 %v2384, %v2380
  %v2585 = vpack.c.b16 %v2385, %v2381
  %v2586 = vpack.c.b16 %v2386, %v2382
  %v2587 = vpack.c.b16 %v2391, %v2387
  %v2588 = vpack.c.b16 %v2392, %v2388
  %v2589 = vpack.c.b16 %v2393, %v2389
  %v2590 = vpack.c.b16 %v2394, %v2390
  %v2591 = vpack.c.b16 %v2399, %v2395
  %v2592 = vpack.c.b16 %v2400, %v2396
  %v2593 = vpack.c.b16 %v2401, %v2397
  %v2594 = vpack.c.b16 %v2402, %v2398
  %v2595 = vpack.c.b16 %v2407, %v2403
  %v2596 = vpack.c.b16 %v2408, %v2404
  %v2597 = vpack.c.b16 %v2409, %v2405
  %v2598 = vpack.c.b16 %v2410, %v2406
  %v2599 = vpack.c.b16 %v2415, %v2411
  %v2600 = vpack.c.b16 %v2416, %v2412
  %v2601 = vpack.c.b16 %v2417, %v2413
  %v2602 = vpack.c.b16 %v2418, %v2414
  %v2603 = vpack.c.b16 %v2423, %v2419
  %v2604 = vpack.c.b16 %v2424, %v2420
  %v2605 = vpack.c.b16 %v2425, %v2421
  %v2606 = vpack.c.b16 %v2426, %v2422
  %v2607 = vpack.c.b16 %v2431, %v2427
  %v2608 = vpack.c.b16 %v2432, %v2428
  %v2609 = vpack.c.b16 %v2433, %v2429
  %v2610 = vpack.c.b16 %v2434, %v2430
  %v2611 = vpack.c.b16 %v2439, %v2435
  %v2612 = vpack.c.b16 %v2440, %v2436
  %v2613 = vpack.c.b16 %v2441, %v2437
  %v2614 = vpack.c.b16 %v2442, %v2438
  %v2615 = vpack.c.b16 %v2447, %v2443
  %v2616 = vpack.c.b16 %v2448, %v2444
  %v2617 = vpack.c.b16 %v2449, %v2445
  %v2618 = vpack.c.b16 %v2450, %v2446
  %v2619 = vpack.c.b16 %v2455, %v2451
  %v2620 = vpack.c.b16 %v2456, %v2452
  %v2621 = vpack.c.b16 %v2457, %v2453
  %v2622 = vpack.c.b16 %v2458, %v2454
  %v2623 = vpack.c.b16 %v2463, %v2459
  %v2624 = vpack.c.b16 %v2464, %v2460
  %v2625 = vpack.c.b16 %v2465, %v2461
  %v2626 = vpack.c.b16 %v2466, %v2462
  %v2627 = vpack.c.b16 %v2471, %v2467
  %v2628 = vpack.c.b16 %v2472, %v2468
  %v2629 = vpack.c.b16 %v2473, %v2469
  %v2630 = vpack.c.b16 %v2474, %v2470
  %v2631 = vpack.c.b16 %v2479, %v2475
  %v2632 = vpack.c.b16 %v2480, %v2476
  %v2633 = vpack.c.b16 %v2481, %v2477
  %v2634 = vpack.c.b16 %v2482, %v2478
  %v2635 = vpack.c.b16 %v2487, %v2483
  %v2636 = vpack.c.b16 %v2488, %v2484
  %v2637 = vpack.c.b16 %v2489, %v2485
  %v2638 = vpack.c.b16 %v2490, %v2486
  %v2639 = vpack.c.b16 %v2495, %v2491
  %v2640 = vpack.c.b16 %v2496, %v2492
  %v2641 = vpack.c.b16 %v2497, %v2493
  %v2642 = vpack.c.b16 %v2498, %v2494
  %v2643 = vpack.c.b16 %v2503, %v2499
  %v2644 = vpack.c.b16 %v2504, %v2500
  %v2645 = vpack.c.b16 %v2505, %v2501
  %v2646 = vpack.c.b16 %v2506, %v2502
  %v2647 = vpack.c.b16 %v2511, %v2507
  %v2648 = vpack.c.b16 %v2512, %v2508
  %v2649 = vpack.c.b16 %v2513, %v2509
  %v2650 = vpack.c.b16 %v2514, %v2510
  %v2651 = vpack.c.b16 %v2519, %v2515
  %v2652 = vpack.c.b16 %v2520, %v2516
  %v2653 = vpack.c.b16 %v2521, %v2517
  %v2654 = vpack.c.b16 %v2522, %v2518
  %v2655 = vpack.c.b16 %v2527, %v2523
  %v2656 = vpack.c.b16 %v2528, %v2524
  %v2657 = vpack.c.b16 %v2529, %v2525
  %v2658 = vpack.c.b16 %v2530, %v2526
  %2787 = vmatprep.subr.bf16.mxu0 %v2532
  %2788 = vmatpush1.bf16.msra.mxu0 %v2531
  %2789 = vmatprep.subr.bf16.mxu0 %v2536
  %2790 = vmatpush1.bf16.msra.mxu0 %v2535
  %2791 = vmatprep.subr.bf16.mxu0 %v2540
  %2792 = vmatpush1.bf16.msra.mxu0 %v2539
  %2793 = vmatprep.subr.bf16.mxu0 %v2544
  %2794 = vmatpush1.bf16.msra.mxu0 %v2543
  %2795 = vmatprep.subr.bf16.mxu0 %v2548
  %2796 = vmatpush1.bf16.msra.mxu0 %v2547
  %2797 = vmatprep.subr.bf16.mxu0 %v2552
  %2798 = vmatpush1.bf16.msra.mxu0 %v2551
  %2799 = vmatprep.subr.bf16.mxu0 %v2556
  %2800 = vmatpush1.bf16.msra.mxu0 %v2555
  %2801 = vmatprep.subr.bf16.mxu0 %v2560
  %2802 = vmatpush1.bf16.msra.mxu0 %v2559
  %2803 = vmatprep.subr.bf16.mxu0 %v2564
  %2804 = vmatpush1.bf16.msra.mxu0 %v2563
  %2805 = vmatprep.subr.bf16.mxu0 %v2568
  %2806 = vmatpush1.bf16.msra.mxu0 %v2567
  %2807 = vmatprep.subr.bf16.mxu0 %v2572
  %2808 = vmatpush1.bf16.msra.mxu0 %v2571
  %2809 = vmatprep.subr.bf16.mxu0 %v2576
  %2810 = vmatpush1.bf16.msra.mxu0 %v2575
  %2811 = vmatprep.subr.bf16.mxu0 %v2580
  %2812 = vmatpush1.bf16.msra.mxu0 %v2579
  %2813 = vmatprep.subr.bf16.mxu0 %v2584
  %2814 = vmatpush1.bf16.msra.mxu0 %v2583
  %2815 = vmatprep.subr.bf16.mxu0 %v2588
  %2816 = vmatpush1.bf16.msra.mxu0 %v2587
  %2817 = vmatprep.subr.bf16.mxu0 %v2592
  %2818 = vmatpush1.bf16.msra.mxu0 %v2591
  %2819 = vmatprep.mubr.bf16.mxu0 %v172
  %2820 = vmatmul.mubr.bf16.gmra.mrb[0].mxu0 %v171
  %v2821 = vpop.f32.mrb[0].mxu0
  %v2822 = vadd.f32 0.0, %v2821
  %v2823 = vpop.f32.mrb[0].mxu0
  %v2824 = vadd.f32 0.0, %v2823
  %v2825 = vpop.f32.mrb[0].mxu0
  %v2826 = vadd.f32 0.0, %v2825
  %v2827 = vpop.f32.mrb[0].mxu0
  %v2828 = vadd.f32 0.0, %v2827
  %2829 = vmatprep.mubr.bf16.mxu0 %v176
  %2830 = vmatmul.mubr.bf16.gmra.mrb[0].mxu0 %v175
  %v2831 = vpop.f32.mrb[0].mxu0
  %v2832 = vadd.f32 0.0, %v2831
  %v2833 = vpop.f32.mrb[0].mxu0
  %v2834 = vadd.f32 0.0, %v2833
  %v2835 = vpop.f32.mrb[0].mxu0
  %v2836 = vadd.f32 0.0, %v2835
  %v2837 = vpop.f32.mrb[0].mxu0
  %v2838 = vadd.f32 0.0, %v2837
  %2839 = vdwg.mxu0
  %2840 = vmatprep.subr.bf16.mxu0 %v2596
  %2841 = vmatpush1.bf16.msra.mxu0 %v2595
  %2842 = vmatprep.subr.bf16.mxu0 %v2600
  %2843 = vmatpush1.bf16.msra.mxu0 %v2599
  %2844 = vmatprep.subr.bf16.mxu0 %v2604
  %2845 = vmatpush1.bf16.msra.mxu0 %v2603
  %2846 = vmatprep.subr.bf16.mxu0 %v2608
  %2847 = vmatpush1.bf16.msra.mxu0 %v2607
  %2848 = vmatprep.subr.bf16.mxu0 %v2612
  %2849 = vmatpush1.bf16.msra.mxu0 %v2611
  %2850 = vmatprep.subr.bf16.mxu0 %v2616
  %2851 = vmatpush1.bf16.msra.mxu0 %v2615
  %2852 = vmatprep.subr.bf16.mxu0 %v2620
  %2853 = vmatpush1.bf16.msra.mxu0 %v2619
  %2854 = vmatprep.subr.bf16.mxu0 %v2624
  %2855 = vmatpush1.bf16.msra.mxu0 %v2623
  %2856 = vmatprep.subr.bf16.mxu0 %v2628
  %2857 = vmatpush1.bf16.msra.mxu0 %v2627
  %2858 = vmatprep.subr.bf16.mxu0 %v2632
  %2859 = vmatpush1.bf16.msra.mxu0 %v2631
  %2860 = vmatprep.subr.bf16.mxu0 %v2636
  %2861 = vmatpush1.bf16.msra.mxu0 %v2635
  %2862 = vmatprep.subr.bf16.mxu0 %v2640
  %2863 = vmatpush1.bf16.msra.mxu0 %v2639
  %2864 = vmatprep.subr.bf16.mxu0 %v2644
  %2865 = vmatpush1.bf16.msra.mxu0 %v2643
  %2866 = vmatprep.subr.bf16.mxu0 %v2648
  %2867 = vmatpush1.bf16.msra.mxu0 %v2647
  %2868 = vmatprep.subr.bf16.mxu0 %v2652
  %2869 = vmatpush1.bf16.msra.mxu0 %v2651
  %2870 = vmatprep.subr.bf16.mxu0 %v2656
  %2871 = vmatpush1.bf16.msra.mxu0 %v2655
  %2872 = vmatprep.mubr.bf16.mxu0 %v174
  %2873 = vmatmul.mubr.bf16.gmra.mrb[0].mxu0 %v173
  %v2874 = vpop.f32.mrb[0].mxu0
  %v2875 = vadd.f32 %v2822, %v2874
  %v2876 = vpop.f32.mrb[0].mxu0
  %v2877 = vadd.f32 %v2824, %v2876
  %v2878 = vpop.f32.mrb[0].mxu0
  %v2879 = vadd.f32 %v2826, %v2878
  %v2880 = vpop.f32.mrb[0].mxu0
  %v2881 = vadd.f32 %v2828, %v2880
  %2882 = vmatprep.mubr.bf16.mxu0 %v178
  %2883 = vmatmul.mubr.bf16.gmra.mrb[0].mxu0 %v177
  %v2884 = vpop.f32.mrb[0].mxu0
  %v2885 = vadd.f32 %v2832, %v2884
  %v2886 = vpop.f32.mrb[0].mxu0
  %v2887 = vadd.f32 %v2834, %v2886
  %v2888 = vpop.f32.mrb[0].mxu0
  %v2889 = vadd.f32 %v2836, %v2888
  %v2890 = vpop.f32.mrb[0].mxu0
  %v2891 = vadd.f32 %v2838, %v2890
  %2892 = vdwg.mxu0
  %2893 = vmatprep.subr.bf16.mxu0 %v2534
  %2894 = vmatpush1.bf16.msra.mxu0 %v2533
  %2895 = vmatprep.subr.bf16.mxu0 %v2538
  %2896 = vmatpush1.bf16.msra.mxu0 %v2537
  %2897 = vmatprep.subr.bf16.mxu0 %v2542
  %2898 = vmatpush1.bf16.msra.mxu0 %v2541
  %2899 = vmatprep.subr.bf16.mxu0 %v2546
  %2900 = vmatpush1.bf16.msra.mxu0 %v2545
  %2901 = vmatprep.subr.bf16.mxu0 %v2550
  %2902 = vmatpush1.bf16.msra.mxu0 %v2549
  %2903 = vmatprep.subr.bf16.mxu0 %v2554
  %2904 = vmatpush1.bf16.msra.mxu0 %v2553
  %2905 = vmatprep.subr.bf16.mxu0 %v2558
  %2906 = vmatpush1.bf16.msra.mxu0 %v2557
  %2907 = vmatprep.subr.bf16.mxu0 %v2562
  %2908 = vmatpush1.bf16.msra.mxu0 %v2561
  %2909 = vmatprep.subr.bf16.mxu0 %v2566
  %2910 = vmatpush1.bf16.msra.mxu0 %v2565
  %2911 = vmatprep.subr.bf16.mxu0 %v2570
  %2912 = vmatpush1.bf16.msra.mxu0 %v2569
  %2913 = vmatprep.subr.bf16.mxu0 %v2574
  %2914 = vmatpush1.bf16.msra.mxu0 %v2573
  %2915 = vmatprep.subr.bf16.mxu0 %v2578
  %2916 = vmatpush1.bf16.msra.mxu0 %v2577
  %2917 = vmatprep.subr.bf16.mxu0 %v2582
  %2918 = vmatpush1.bf16.msra.mxu0 %v2581
  %2919 = vmatprep.subr.bf16.mxu0 %v2586
  %2920 = vmatpush1.bf16.msra.mxu0 %v2585
  %2921 = vmatprep.subr.bf16.mxu0 %v2590
  %2922 = vmatpush1.bf16.msra.mxu0 %v2589
  %2923 = vmatprep.subr.bf16.mxu0 %v2594
  %2924 = vmatpush1.bf16.msra.mxu0 %v2593
  %2925 = vmatprep.mubr.bf16.mxu0 %v172
  %2926 = vmatmul.mubr.bf16.gmra.mrb[0].mxu0 %v171
  %v2927 = vpop.f32.mrb[0].mxu0
  %v2928 = vadd.f32 0.0, %v2927
  %v2929 = vpop.f32.mrb[0].mxu0
  %v2930 = vadd.f32 0.0, %v2929
  %v2931 = vpop.f32.mrb[0].mxu0
  %v2932 = vadd.f32 0.0, %v2931
  %v2933 = vpop.f32.mrb[0].mxu0
  %v2934 = vadd.f32 0.0, %v2933
  %2935 = vmatprep.mubr.bf16.mxu0 %v176
  %2936 = vmatmul.mubr.bf16.gmra.mrb[0].mxu0 %v175
  %v2937 = vpop.f32.mrb[0].mxu0
  %v2938 = vadd.f32 0.0, %v2937
  %v2939 = vpop.f32.mrb[0].mxu0
  %v2940 = vadd.f32 0.0, %v2939
  %v2941 = vpop.f32.mrb[0].mxu0
  %v2942 = vadd.f32 0.0, %v2941
  %v2943 = vpop.f32.mrb[0].mxu0
  %v2944 = vadd.f32 0.0, %v2943
  %2945 = vdwg.mxu0
  %2946 = vmatprep.subr.bf16.mxu0 %v2598
  %2947 = vmatpush1.bf16.msra.mxu0 %v2597
  %2948 = vmatprep.subr.bf16.mxu0 %v2602
  %2949 = vmatpush1.bf16.msra.mxu0 %v2601
  %2950 = vmatprep.subr.bf16.mxu0 %v2606
  %2951 = vmatpush1.bf16.msra.mxu0 %v2605
  %2952 = vmatprep.subr.bf16.mxu0 %v2610
  %2953 = vmatpush1.bf16.msra.mxu0 %v2609
  %2954 = vmatprep.subr.bf16.mxu0 %v2614
  %2955 = vmatpush1.bf16.msra.mxu0 %v2613
  %2956 = vmatprep.subr.bf16.mxu0 %v2618
  %2957 = vmatpush1.bf16.msra.mxu0 %v2617
  %2958 = vmatprep.subr.bf16.mxu0 %v2622
  %2959 = vmatpush1.bf16.msra.mxu0 %v2621
  %2960 = vmatprep.subr.bf16.mxu0 %v2626
  %2961 = vmatpush1.bf16.msra.mxu0 %v2625
  %2962 = vmatprep.subr.bf16.mxu0 %v2630
  %2963 = vmatpush1.bf16.msra.mxu0 %v2629
  %2964 = vmatprep.subr.bf16.mxu0 %v2634
  %2965 = vmatpush1.bf16.msra.mxu0 %v2633
  %2966 = vmatprep.subr.bf16.mxu0 %v2638
  %2967 = vmatpush1.bf16.msra.mxu0 %v2637
  %2968 = vmatprep.subr.bf16.mxu0 %v2642
  %2969 = vmatpush1.bf16.msra.mxu0 %v2641
  %2970 = vmatprep.subr.bf16.mxu0 %v2646
  %2971 = vmatpush1.bf16.msra.mxu0 %v2645
  %2972 = vmatprep.subr.bf16.mxu0 %v2650
  %2973 = vmatpush1.bf16.msra.mxu0 %v2649
  %2974 = vmatprep.subr.bf16.mxu0 %v2654
  %2975 = vmatpush1.bf16.msra.mxu0 %v2653
  %2976 = vmatprep.subr.bf16.mxu0 %v2658
  %2977 = vmatpush1.bf16.msra.mxu0 %v2657
  %2978 = vmatprep.mubr.bf16.mxu0 %v174
  %2979 = vmatmul.mubr.bf16.gmra.mrb[0].mxu0 %v173
  %v2980 = vpop.f32.mrb[0].mxu0
  %v2981 = vadd.f32 %v2928, %v2980
  %v2982 = vpop.f32.mrb[0].mxu0
  %v2983 = vadd.f32 %v2930, %v2982
  %v2984 = vpop.f32.mrb[0].mxu0
  %v2985 = vadd.f32 %v2932, %v2984
  %v2986 = vpop.f32.mrb[0].mxu0
  %v2987 = vadd.f32 %v2934, %v2986
  %2988 = vmatprep.mubr.bf16.mxu0 %v178
  %2989 = vmatmul.mubr.bf16.gmra.mrb[0].mxu0 %v177
  %v2990 = vpop.f32.mrb[0].mxu0
  %v2991 = vadd.f32 %v2938, %v2990
  %v2992 = vpop.f32.mrb[0].mxu0
  %v2993 = vadd.f32 %v2940, %v2992
  %v2994 = vpop.f32.mrb[0].mxu0
  %v2995 = vadd.f32 %v2942, %v2994
  %v2996 = vpop.f32.mrb[0].mxu0
  %v2997 = vadd.f32 %v2944, %v2996
  %2998 = vdwg.mxu0
  %v2999 = vlaneseq
  %v3000 = vshrl.u32 %v2999, 7
  %v3001 = vadd.s32 %v3000, 8
  %v3002 = vadd.s32 %v3000, 16
  %v3003 = vadd.s32 %v3000, 24
  %vm3004 = vcmp.lt.s32.totalorder %v3000, 0
  %v3005 = vsub.s32 0, %v3000
  %v3006 = vsel %vm3004, %v3005, %v3000
  %v3007 = vshrl.u32 %v3006, 4
  %v3008 = vand.u32 %v3006, 15
  %v3009 = vsub.s32 0, %v3008
  %v3010 = vsel %vm3004, %v3009, %v3008
  %vm3011 = vcmp.lt.s32.totalorder %v3001, 0
  %v3012 = vsub.s32 0, %v3001
  %v3013 = vsel %vm3011, %v3012, %v3001
  %v3014 = vshrl.u32 %v3013, 4
  %v3015 = vand.u32 %v3013, 15
  %v3016 = vsub.s32 0, %v3015
  %v3017 = vsel %vm3011, %v3016, %v3015
  %vm3018 = vcmp.lt.s32.totalorder %v3002, 0
  %v3019 = vsub.s32 0, %v3002
  %v3020 = vsel %vm3018, %v3019, %v3002
  %v3021 = vshrl.u32 %v3020, 4
  %v3022 = vand.u32 %v3020, 15
  %v3023 = vsub.s32 0, %v3022
  %v3024 = vsel %vm3018, %v3023, %v3022
  %vm3025 = vcmp.lt.s32.totalorder %v3003, 0
  %v3026 = vsub.s32 0, %v3003
  %v3027 = vsel %vm3025, %v3026, %v3003
  %v3028 = vshrl.u32 %v3027, 4
  %v3029 = vand.u32 %v3027, 15
  %v3030 = vsub.s32 0, %v3029
  %v3031 = vsel %vm3025, %v3030, %v3029
  %vm3032 = vcmp.ne.s32.totalorder %v3010, 0
  %vm3033 = vcmp.ne.s32.totalorder %v3017, 0
  %vm3034 = vcmp.ne.s32.totalorder %v3024, 0
  %vm3035 = vcmp.ne.s32.totalorder %v3031, 0
  %vm3036 = vcmp.lt.s32.totalorder %v3010, 0
  %vm3037 = vcmp.lt.s32.totalorder %v3017, 0
  %vm3038 = vcmp.lt.s32.totalorder %v3024, 0
  %vm3039 = vcmp.lt.s32.totalorder %v3031, 0
  %vm3040 = vmand %vm3036, %vm3032
  %vm3041 = vmand %vm3037, %vm3033
  %vm3042 = vmand %vm3038, %vm3034
  %vm3043 = vmand %vm3039, %vm3035
  %v3044 = vadd.s32 %v3010, 16
  %v3045 = vadd.s32 %v3017, 16
  %v3046 = vadd.s32 %v3024, 16
  %v3047 = vadd.s32 %v3031, 16
  %v3048 = vsel %vm3040, %v3044, %v3010
  %v3049 = vsel %vm3041, %v3045, %v3017
  %v3050 = vsel %vm3042, %v3046, %v3024
  %v3051 = vsel %vm3043, %v3047, %v3031
  %vm3052 = vcmp.ne.s32.totalorder %v3048, 0
  %vm3053 = vcmp.ne.s32.totalorder %v3049, 0
  %vm3054 = vcmp.ne.s32.totalorder %v3050, 0
  %vm3055 = vcmp.ne.s32.totalorder %v3051, 0
  %v3056 = vrot.slane %v915, 7
  %v3057 = vrot.slane %v917, 7
  %v3058 = vrot.slane %v1021, 7
  %v3059 = vrot.slane %v1023, 7
  %v3060 = vrot.slane %v919, 7
  %v3061 = vrot.slane %v921, 7
  %v3062 = vrot.slane %v1025, 7
  %v3063 = vrot.slane %v1027, 7
  %v3064 = vrot.slane %v925, 7
  %v3065 = vrot.slane %v927, 7
  %v3066 = vrot.slane %v1031, 7
  %v3067 = vrot.slane %v1033, 7
  %v3068 = vrot.slane %v929, 7
  %v3069 = vrot.slane %v931, 7
  %v3070 = vrot.slane %v1035, 7
  %v3071 = vrot.slane %v1037, 7
  %vm3072 = vcmp.lt.s32.totalorder %v3000, 1
  %v3073 = vsel %vm3072, %v3064, %v3068
  %v3074 = vsel %vm3072, %v3065, %v3069
  %v3075 = vsel %vm3072, %v3066, %v3070
  %v3076 = vsel %vm3072, %v3067, %v3071
  %v3077 = vsel %vm3072, %v3060, %v3064
  %v3078 = vsel %vm3072, %v3061, %v3065
  %v3079 = vsel %vm3072, %v3062, %v3066
  %v3080 = vsel %vm3072, %v3063, %v3067
  %v3081 = vsel %vm3072, %v3056, %v3060
  %v3082 = vsel %vm3072, %v3057, %v3061
  %v3083 = vsel %vm3072, %v3058, %v3062
  %v3084 = vsel %vm3072, %v3059, %v3063
  %v3085 = vsel %vm3072, %v3068, %v3056
  %v3086 = vsel %vm3072, %v3069, %v3057
  %v3087 = vsel %vm3072, %v3070, %v3058
  %v3088 = vsel %vm3072, %v3071, %v3059
  %v3089 = vsel %vm3052, %v3085, 0.0
  %v3090 = vsel %vm3052, %v3086, 0.0
  %v3091 = vsel %vm3052, %v3087, 0.0
  %v3092 = vsel %vm3052, %v3088, 0.0
  %v3093 = vsel %vm3053, %v3081, 0.0
  %v3094 = vsel %vm3053, %v3082, 0.0
  %v3095 = vsel %vm3053, %v3083, 0.0
  %v3096 = vsel %vm3053, %v3084, 0.0
  %v3097 = vsel %vm3054, %v3077, 0.0
  %v3098 = vsel %vm3054, %v3078, 0.0
  %v3099 = vsel %vm3054, %v3079, 0.0
  %v3100 = vsel %vm3054, %v3080, 0.0
  %v3101 = vsel %vm3055, %v3073, 0.0
  %v3102 = vsel %vm3055, %v3074, 0.0
  %v3103 = vsel %vm3055, %v3075, 0.0
  %v3104 = vsel %vm3055, %v3076, 0.0
  %vm3105 = vcmp.ne.s32.totalorder %v3048, 15
  %vm3106 = vcmp.ne.s32.totalorder %v3049, 15
  %vm3107 = vcmp.ne.s32.totalorder %v3050, 15
  %vm3108 = vcmp.ne.s32.totalorder %v3051, 15
  %v3109 = vrot.slane %v2875, 1
  %v3110 = vrot.slane %v2877, 1
  %v3111 = vrot.slane %v2981, 1
  %v3112 = vrot.slane %v2983, 1
  %v3113 = vrot.slane %v2879, 1
  %v3114 = vrot.slane %v2881, 1
  %v3115 = vrot.slane %v2985, 1
  %v3116 = vrot.slane %v2987, 1
  %v3117 = vrot.slane %v2885, 1
  %v3118 = vrot.slane %v2887, 1
  %v3119 = vrot.slane %v2991, 1
  %v3120 = vrot.slane %v2993, 1
  %v3121 = vrot.slane %v2889, 1
  %v3122 = vrot.slane %v2891, 1
  %v3123 = vrot.slane %v2995, 1
  %v3124 = vrot.slane %v2997, 1
  %vm3125 = vcmp.lt.s32.totalorder %v3000, 7
  %v3126 = vsel %vm3125, %v3117, %v3121
  %v3127 = vsel %vm3125, %v3118, %v3122
  %v3128 = vsel %vm3125, %v3119, %v3123
  %v3129 = vsel %vm3125, %v3120, %v3124
  %v3130 = vsel %vm3125, %v3113, %v3117
  %v3131 = vsel %vm3125, %v3114, %v3118
  %v3132 = vsel %vm3125, %v3115, %v3119
  %v3133 = vsel %vm3125, %v3116, %v3120
  %v3134 = vsel %vm3125, %v3109, %v3113
  %v3135 = vsel %vm3125, %v3110, %v3114
  %v3136 = vsel %vm3125, %v3111, %v3115
  %v3137 = vsel %vm3125, %v3112, %v3116
  %v3138 = vsel %vm3125, %v3121, %v3109
  %v3139 = vsel %vm3125, %v3122, %v3110
  %v3140 = vsel %vm3125, %v3123, %v3111
  %v3141 = vsel %vm3125, %v3124, %v3112
  %v3142 = vsel %vm3105, %v3134, 0.0
  %v3143 = vsel %vm3105, %v3135, 0.0
  %v3144 = vsel %vm3105, %v3136, 0.0
  %v3145 = vsel %vm3105, %v3137, 0.0
  %v3146 = vsel %vm3106, %v3130, 0.0
  %v3147 = vsel %vm3106, %v3131, 0.0
  %v3148 = vsel %vm3106, %v3132, 0.0
  %v3149 = vsel %vm3106, %v3133, 0.0
  %v3150 = vsel %vm3107, %v3126, 0.0
  %v3151 = vsel %vm3107, %v3127, 0.0
  %v3152 = vsel %vm3107, %v3128, 0.0
  %v3153 = vsel %vm3107, %v3129, 0.0
  %v3154 = vsel %vm3108, %v3138, 0.0
  %v3155 = vsel %vm3108, %v3139, 0.0
  %v3156 = vsel %vm3108, %v3140, 0.0
  %v3157 = vsel %vm3108, %v3141, 0.0
  %v3158 = vadd.f32 %v3089, %v1895
  %v3159 = vadd.f32 %v3090, %v1897
  %v3160 = vadd.f32 %v3091, %v2001
  %v3161 = vadd.f32 %v3092, %v2003
  %v3162 = vadd.f32 %v3093, %v1899
  %v3163 = vadd.f32 %v3094, %v1901
  %v3164 = vadd.f32 %v3095, %v2005
  %v3165 = vadd.f32 %v3096, %v2007
  %v3166 = vadd.f32 %v3097, %v1905
  %v3167 = vadd.f32 %v3098, %v1907
  %v3168 = vadd.f32 %v3099, %v2011
  %v3169 = vadd.f32 %v3100, %v2013
  %v3170 = vadd.f32 %v3101, %v1909
  %v3171 = vadd.f32 %v3102, %v1911
  %v3172 = vadd.f32 %v3103, %v2015
  %v3173 = vadd.f32 %v3104, %v2017
  %v3174 = vadd.f32 %v3158, %v3142
  %v3175 = vadd.f32 %v3159, %v3143
  %v3176 = vadd.f32 %v3160, %v3144
  %v3177 = vadd.f32 %v3161, %v3145
  %v3178 = vadd.f32 %v3162, %v3146
  %v3179 = vadd.f32 %v3163, %v3147
  %v3180 = vadd.f32 %v3164, %v3148
  %v3181 = vadd.f32 %v3165, %v3149
  %v3182 = vadd.f32 %v3166, %v3150
  %v3183 = vadd.f32 %v3167, %v3151
  %v3184 = vadd.f32 %v3168, %v3152
  %v3185 = vadd.f32 %v3169, %v3153
  %v3186 = vadd.f32 %v3170, %v3154
  %v3187 = vadd.f32 %v3171, %v3155
  %v3188 = vadd.f32 %v3172, %v3156
  %v3189 = vadd.f32 %v3173, %v3157
  %3190 = vst [vmem:[%s2] sm:$0xff] %v3174
  %3191 = vst [vmem:[%s2 + $0x8] sm:$0xff] %v3175
  %3192 = vst [vmem:[%s2 + $0x10] sm:$0xff] %v3176
  %3193 = vst [vmem:[%s2 + $0x18] sm:$0xff] %v3177
  %3194 = vst [vmem:[%s2 + $0x20] sm:$0xff] %v3178
  %3195 = vst [vmem:[%s2 + $0x28] sm:$0xff] %v3179
  %3196 = vst [vmem:[%s2 + $0x30] sm:$0xff] %v3180
  %3197 = vst [vmem:[%s2 + $0x38] sm:$0xff] %v3181
  %3198 = vst [vmem:[%s2 + $0x40] sm:$0xff] %v3182
  %3199 = vst [vmem:[%s2 + $0x48] sm:$0xff] %v3183
  %3200 = vst [vmem:[%s2 + $0x50] sm:$0xff] %v3184
  %3201 = vst [vmem:[%s2 + $0x58] sm:$0xff] %v3185
  %3202 = vst [vmem:[%s2 + $0x60] sm:$0xff] %v3186
  %3203 = vst [vmem:[%s2 + $0x68] sm:$0xff] %v3187
  %3204 = vst [vmem:[%s2 + $0x70] sm:$0xff] %v3188
  %3205 = vst [vmem:[%s2 + $0x78] sm:$0xff] %v3189
  // Predicated region
  $region10: #{conv_transpose2d_pallas.1} parent=0 // pred_check
    _
  $region11: #{conv_transpose2d_pallas.1} parent=0 // pred_check_branch
    %3207 = sbr.rel (0) target = $region13
  $region12: #{conv_transpose2d_pallas.1} parent=0 // pred_region
    _
  $region13: #{conv_transpose2d_pallas.1} parent=0 // pred_fallthru
    _
  // Predicated region
  $region14: #{conv_transpose2d_pallas.1} parent=0 // pred_check
    _
  $region15: #{conv_transpose2d_pallas.1} parent=0 // pred_check_branch
    %3209 = sbr.rel (0) target = $region17
  $region16: #{conv_transpose2d_pallas.1} parent=0 // pred_region
    _
  $region17: #{conv_transpose2d_pallas.1} parent=0 // pred_fallthru
    _

</llo_original>
